<compile_context>
chip_gen: v7x
topology: tpu7x:2x2x1
jax: 0.10.0
libtpu: 0.0.40
codegen_flags: <defaults>
</compile_context>

<pallas_src>
import functools

import jax
import jax.numpy as jnp
from jax import lax
from jax.experimental import pallas as pl
from jax.experimental.pallas import tpu as pltpu


def cross_attention_block_kernel(x_ref, g_ref, b_ref, wq_ref, wkv_ref, wp_ref, bp_ref,
                                 o_ref, *, num_heads, head_dim, scale, eps):
    # x_ref block: (Bt, N, C) -- a tile of batch elements per grid step.
    x = x_ref[...]
    Bt, N, C = x.shape
    cdt = x.dtype

    # ---- LayerNorm (stats in f32) ------------------------------------------
    xf = x.astype(jnp.float32)
    mean = jnp.mean(xf, axis=-1, keepdims=True)
    cen = xf - mean
    var = jnp.mean(cen * cen, axis=-1, keepdims=True)
    xn = cen * lax.rsqrt(var + eps)
    xn = xn * g_ref[...].astype(jnp.float32) + b_ref[...].astype(jnp.float32)
    xn = xn.astype(cdt)                                         # (Bt, N, C)

    # ---- projections (MXU, native-dtype operands, f32 accumulation) ---------
    q = jnp.dot(xn[:, 0, :], wq_ref[...],
                preferred_element_type=jnp.float32)             # (Bt, C)
    kv = jnp.dot(xn.reshape(Bt * N, C), wkv_ref[...],
                 preferred_element_type=jnp.float32)            # (Bt*N, 2C)
    k = kv[:, :C].reshape(Bt, N, C)
    v = kv[:, C:].reshape(Bt, N, C)

    # ---- per-head attention without a Python head loop ----------------------
    # Head-membership mask built on the VPU (no DMA, no extra pipeline buffers):
    # hmask[h, c] = 1 iff channel c belongs to head h (block diagonal, exact 0/1).
    row = lax.broadcasted_iota(jnp.int32, (num_heads, C), 0)
    col = lax.broadcasted_iota(jnp.int32, (num_heads, C), 1)
    lo = row * head_dim
    hmask = ((col >= lo) & (col < lo + head_dim)).astype(cdt)   # (H, C)

    # scores[b, n, h] = sum_{c in head h} q[b, c] * k[b, n, c]
    # Native-dtype operands -> single MXU pass on bf16 hardware; f32 accumulation.
    qk = (k * q[:, None, :]).astype(cdt).reshape(Bt * N, C)
    s = lax.dot_general(qk, hmask, (((1,), (1,)), ((), ())),
                        preferred_element_type=jnp.float32)     # (Bt*N, H)
    s = s.reshape(Bt, N, num_heads) * scale

    # softmax over the key axis N, per (batch, head); exact normalization
    m = jnp.max(s, axis=1, keepdims=True)
    e = jnp.exp(s - m)
    attn = e / jnp.sum(e, axis=1, keepdims=True)                # (Bt, N, H), f32

    # attn_full[b, n, c] = attn[b, n, head(c)]   (broadcast attention over head channels)
    attn_full = jnp.dot(attn.astype(cdt).reshape(Bt * N, num_heads), hmask,
                        preferred_element_type=jnp.float32).reshape(Bt, N, C)
    ctx = jnp.sum(attn_full * v, axis=1)                        # (Bt, C)

    # ---- output projection + bias + residual with the ORIGINAL CLS token ----
    proj = jnp.dot(ctx.astype(cdt), wp_ref[...],
                   preferred_element_type=jnp.float32) + bp_ref[...].astype(jnp.float32)
    o_ref[...] = (xf[:, 0, :] + proj).astype(o_ref.dtype)       # lane-dense (Bt, C) store


def _tpu_vmem_capacity_bytes():
    try:
        return int(pltpu.get_tpu_info().vmem_capacity_bytes)
    except Exception:
        return 64 * 1024 * 1024   # conservative default: v7x per-TensorCore VMEM


def _pick_block_b(B, per_b_bytes, avail_bytes, max_bt=128):
    """Largest sublane-aligned batch tile that fits the VMEM budget estimate."""
    if avail_bytes > 0:
        cap = max(1, min(max_bt, int(avail_bytes // max(per_b_bytes, 1))))
    else:
        cap = 1
    # Legal block sizes: multiples of 8 that divide B (unmasked lane-dense stores on the
    # (block_b, C) output block), or the full batch (block == full dim is always legal).
    cands = [d for d in range(8, B, 8) if B % d == 0] + [B]
    fitting = [d for d in cands if d <= cap]
    if not fitting:
        # Budget estimate is conservative; take the smallest legal tile.
        return min(cands)
    tiled = [d for d in fitting if d < B]
    if tiled and B >= 16:
        # Keep grid >= 2 so dimension_semantics=("parallel",) can use both v7x cores.
        return max(tiled)
    return max(fitting)


def prepare_cross_attention_weights(ln_w, ln_b, wq, wk, wv, wp, proj_b):
    """One-time weight prep (transpose to (in, out), fuse K/V). Cache & reuse per call."""
    C = wq.shape[0]
    wq_t = wq.T                                     # (C, C)
    wkv_t = jnp.concatenate([wk.T, wv.T], axis=1)   # (C, 2C)
    wp_t = wp.T                                     # (C, C)
    gamma = ln_w.reshape(1, C)
    beta = ln_b.reshape(1, C)
    bproj = proj_b.reshape(1, C)
    return (wq_t, wkv_t, wp_t, gamma, beta, bproj)


def cross_attention_block(x, prepared_weights, *, num_heads, eps=1e-5, qk_scale=None,
                          block_b=None, vmem_limit_bytes=None):
    wq_t, wkv_t, wp_t, gamma, beta, bproj = prepared_weights
    B, N, C = x.shape
    assert C % num_heads == 0, "dim must be divisible by num_heads"
    head_dim = C // num_heads
    scale = float(qk_scale) if qk_scale is not None else head_dim ** (-0.5)

    isz = jnp.dtype(x.dtype).itemsize
    cap = _tpu_vmem_capacity_bytes()
    weights_bytes = (4 * C * C + 3 * C) * isz

    if block_b is None:
        # Per-batch-element working set: 2x x tile (double-buffered), xn, qk (native
        # dtype), kv/attn_full/products (f32), plus the output tile.
        per_b = (4 * isz + 6 * 4) * N * C + 2 * C * isz
        avail = int(cap * 0.7) - 2 * weights_bytes - (4 << 20)
        block_b = _pick_block_b(B, per_b, avail)
    assert B % block_b == 0, f"block_b={block_b} must divide B={B}"

    if vmem_limit_bytes is None:
        est = (2 * block_b * N * C * isz          # double-buffered x tile
               + 2 * block_b * C * isz            # double-buffered output tile
               + 2 * weights_bytes                # weights (worst case: double-buffered)
               + 6 * block_b * N * C * 4          # f32 intermediates headroom
               + (4 << 20))                       # fixed margin
        vmem_limit_bytes = min(int(cap * 0.9), max(est, 32 << 20))

    kernel = functools.partial(cross_attention_block_kernel,
                               num_heads=num_heads, head_dim=head_dim,
                               scale=scale, eps=eps)

    def _run(single_buffer_weights):
        const = lambda i: (0, 0)
        if single_buffer_weights:
            # Constant index_map -> DMA'd once; single buffer avoids a dead 2nd copy of
            # the resident 4*C^2 weights.
            wspec = lambda shp: pl.BlockSpec(shp, const, pipeline_mode=pl.Buffered(1))
        else:
            wspec = lambda shp: pl.BlockSpec(shp, const)
        return pl.pallas_call(
            kernel,
            out_shape=jax.ShapeDtypeStruct((B, C), x.dtype),
            grid=(B // block_b,),
            in_specs=[
                pl.BlockSpec((block_b, N, C), lambda i: (i, 0, 0)),  # x tile
                wspec((1, C)),                                       # LN weight
                wspec((1, C)),                                       # LN bias
                wspec((C, C)),                                       # Wq^T
                wspec((C, 2 * C)),                                   # [Wk^T | Wv^T]
                wspec((C, C)),                                       # Wp^T
                wspec((1, C)),                                       # proj bias
            ],
            out_specs=pl.BlockSpec((block_b, C), lambda i: (i, 0)),  # lane-dense slab
            compiler_params=pltpu.CompilerParams(
                dimension_semantics=("parallel",),
                vmem_limit_bytes=int(vmem_limit_bytes),
            ),
        )(x, gamma, beta, wq_t, wkv_t, wp_t, bproj)

    try:
        out2d = _run(True)
    except Exception:
        # Fallback: this Mosaic build does not accept single-buffered (Buffered(1))
        # pipeline mode; default double-buffered weights are a perf-only difference.
        out2d = _run(False)

    return out2d.reshape(B, 1, C)


def cross_attention_block_ref(x, ln_w, ln_b, wq, wk, wv, wp, proj_b, *, num_heads, eps=1e-5):
    """Pure-JAX reference mirroring the PyTorch CrossAttentionBlock.forward."""
    B, N, C = x.shape
    hd = C // num_heads
    scale = hd ** (-0.5)
    mean = jnp.mean(x, axis=-1, keepdims=True)
    var = jnp.mean((x - mean) ** 2, axis=-1, keepdims=True)
    xn = (x - mean) / jnp.sqrt(var + eps) * ln_w + ln_b
    q = (xn[:, 0:1] @ wq.T).reshape(B, 1, num_heads, hd).transpose(0, 2, 1, 3)
    k = (xn @ wk.T).reshape(B, N, num_heads, hd).transpose(0, 2, 1, 3)
    v = (xn @ wv.T).reshape(B, N, num_heads, hd).transpose(0, 2, 1, 3)
    attn = jax.nn.softmax((q @ jnp.swapaxes(k, -1, -2)) * scale, axis=-1)
    out = (attn @ v).transpose(0, 2, 1, 3).reshape(B, 1, C)
    out = out @ wp.T + proj_b
    return x[:, 0:1] + out


if __name__ == "__main__":
    B, N, C = 2, 8, 32
    num_heads = 4

    key = jax.random.PRNGKey(0)
    kx, kg, kb, kq, kk, kv, kp, kpb = jax.random.split(key, 8)

    x = jax.random.normal(kx, (B, N, C), dtype=jnp.float32)
    ln_w = 1.0 + 0.1 * jax.random.normal(kg, (C,), dtype=jnp.float32)
    ln_b = 0.1 * jax.random.normal(kb, (C,), dtype=jnp.float32)
    wq = 0.05 * jax.random.normal(kq, (C, C), dtype=jnp.float32)
    wk = 0.05 * jax.random.normal(kk, (C, C), dtype=jnp.float32)
    wv = 0.05 * jax.random.normal(kv, (C, C), dtype=jnp.float32)
    wp = 0.05 * jax.random.normal(kp, (C, C), dtype=jnp.float32)
    proj_b = 0.05 * jax.random.normal(kpb, (C,), dtype=jnp.float32)

    # Weight prep (transpose + K/V fuse) is hoisted out of the per-call wrapper: do it
    # once and reuse `prepared` for every forward call.
    prepared = prepare_cross_attention_weights(ln_w, ln_b, wq, wk, wv, wp, proj_b)

    out = cross_attention_block(x, prepared, num_heads=num_heads)
    out = jax.block_until_ready(out)

    ref = cross_attention_block_ref(x, ln_w, ln_b, wq, wk, wv, wp, proj_b, num_heads=num_heads)
    assert out.shape == (B, 1, C)
    max_diff = jnp.max(jnp.abs(out - ref))
    # Exact softmax normalization (no approx reciprocal) -> tight tolerance.
    assert jnp.allclose(out, ref, atol=1e-4, rtol=1e-4), f"mismatch vs reference, max|diff|={max_diff}"

    print("KERNEL_OK")
</pallas_src>

<mosaic_0001>
module attributes {stable_mosaic.version = 11 : i64} {
  func.func @cross_attention_block_kernel(%arg0: i32, %arg1: memref<2x8x32xf32, #tpu.memory_space<vmem>>, %arg2: memref<1x32xf32, #tpu.memory_space<vmem>>, %arg3: memref<1x32xf32, #tpu.memory_space<vmem>>, %arg4: memref<32x32xf32, #tpu.memory_space<vmem>>, %arg5: memref<32x64xf32, #tpu.memory_space<vmem>>, %arg6: memref<32x32xf32, #tpu.memory_space<vmem>>, %arg7: memref<1x32xf32, #tpu.memory_space<vmem>>, %arg8: memref<2x32xf32, #tpu.memory_space<vmem>>) attributes {dimension_semantics = [#tpu.dimension_semantics<parallel>], iteration_bounds = array<i64: 1>, scalar_prefetch = 0 : i64, scratch_operands = 0 : i64, tpu.core_type = #tpu.core_type<tc>, window_params = [{transform_indices = @transform_0, window_bounds = array<i64: 2, 8, 32>}, {pipeline_mode = #tpu.pipeline_mode<synchronous>, transform_indices = @transform_1, window_bounds = array<i64: 1, 32>}, {pipeline_mode = #tpu.pipeline_mode<synchronous>, transform_indices = @transform_2, window_bounds = array<i64: 1, 32>}, {pipeline_mode = #tpu.pipeline_mode<synchronous>, transform_indices = @transform_3, window_bounds = array<i64: 32, 32>}, {pipeline_mode = #tpu.pipeline_mode<synchronous>, transform_indices = @transform_4, window_bounds = array<i64: 32, 64>}, {pipeline_mode = #tpu.pipeline_mode<synchronous>, transform_indices = @transform_5, window_bounds = array<i64: 32, 32>}, {pipeline_mode = #tpu.pipeline_mode<synchronous>, transform_indices = @transform_6, window_bounds = array<i64: 1, 32>}, {transform_indices = @transform_7, window_bounds = array<i64: 2, 32>}]} {
    %c0 = arith.constant 0 : index
    %c0_0 = arith.constant 0 : index
    %c0_1 = arith.constant 0 : index
    %0 = vector.load %arg1[%c0, %c0_0, %c0_1] : memref<2x8x32xf32, #tpu.memory_space<vmem>>, vector<2x8x32xf32>
    %cst = arith.constant dense<0.000000e+00> : vector<2x8xf32>
    %1 = vector.multi_reduction <add>, %0, %cst [2] : vector<2x8x32xf32> to vector<2x8xf32>
    %2 = vector.shape_cast %1 : vector<2x8xf32> to vector<2x8x1xf32>
    %cst_2 = arith.constant 3.200000e+01 : f32
    %3 = vector.broadcast %cst_2 : f32 to vector<2x8x1xf32>
    %4 = arith.divf %2, %3 : vector<2x8x1xf32>
    %5 = vector.broadcast %4 : vector<2x8x1xf32> to vector<2x8x32xf32>
    %6 = arith.subf %0, %5 : vector<2x8x32xf32>
    %7 = arith.mulf %6, %6 : vector<2x8x32xf32>
    %cst_3 = arith.constant dense<0.000000e+00> : vector<2x8xf32>
    %8 = vector.multi_reduction <add>, %7, %cst_3 [2] : vector<2x8x32xf32> to vector<2x8xf32>
    %9 = vector.shape_cast %8 : vector<2x8xf32> to vector<2x8x1xf32>
    %cst_4 = arith.constant 3.200000e+01 : f32
    %10 = vector.broadcast %cst_4 : f32 to vector<2x8x1xf32>
    %11 = arith.divf %9, %10 : vector<2x8x1xf32>
    %cst_5 = arith.constant 9.99999974E-6 : f32
    %12 = vector.broadcast %cst_5 : f32 to vector<2x8x1xf32>
    %13 = arith.addf %11, %12 : vector<2x8x1xf32>
    %14 = math.rsqrt %13 : vector<2x8x1xf32>
    %15 = vector.broadcast %14 : vector<2x8x1xf32> to vector<2x8x32xf32>
    %16 = arith.mulf %6, %15 : vector<2x8x32xf32>
    %c0_6 = arith.constant 0 : index
    %c0_7 = arith.constant 0 : index
    %17 = vector.load %arg2[%c0_6, %c0_7] : memref<1x32xf32, #tpu.memory_space<vmem>>, vector<1x32xf32>
    %18 = vector.shape_cast %17 : vector<1x32xf32> to vector<1x1x32xf32>
    %19 = vector.broadcast %18 : vector<1x1x32xf32> to vector<2x8x32xf32>
    %20 = arith.mulf %16, %19 : vector<2x8x32xf32>
    %c0_8 = arith.constant 0 : index
    %c0_9 = arith.constant 0 : index
    %21 = vector.load %arg3[%c0_8, %c0_9] : memref<1x32xf32, #tpu.memory_space<vmem>>, vector<1x32xf32>
    %22 = vector.shape_cast %21 : vector<1x32xf32> to vector<1x1x32xf32>
    %23 = vector.broadcast %22 : vector<1x1x32xf32> to vector<2x8x32xf32>
    %24 = arith.addf %20, %23 : vector<2x8x32xf32>
    %25 = vector.extract_strided_slice %24 {offsets = [0, 0, 0], sizes = [2, 1, 32], strides = [1, 1, 1]} : vector<2x8x32xf32> to vector<2x1x32xf32>
    %26 = vector.shape_cast %25 : vector<2x1x32xf32> to vector<2x32xf32>
    %c0_10 = arith.constant 0 : index
    %c0_11 = arith.constant 0 : index
    %27 = vector.load %arg4[%c0_10, %c0_11] : memref<32x32xf32, #tpu.memory_space<vmem>>, vector<32x32xf32>
    %cst_12 = arith.constant dense<0.000000e+00> : vector<2x32xf32>
    %28 = tpu.matmul %26, %27, %cst_12 {dimension_numbers = #tpu.dot_dimension_numbers<[1], [0], [0], [1], [0, 0, 1, 1], [], []>} : vector<2x32xf32>, vector<32x32xf32>, vector<2x32xf32> -> vector<2x32xf32>
    %29 = vector.shape_cast %24 : vector<2x8x32xf32> to vector<16x32xf32>
    %c0_13 = arith.constant 0 : index
    %c0_14 = arith.constant 0 : index
    %30 = vector.load %arg5[%c0_13, %c0_14] : memref<32x64xf32, #tpu.memory_space<vmem>>, vector<32x64xf32>
    %cst_15 = arith.constant dense<0.000000e+00> : vector<16x64xf32>
    %31 = tpu.matmul %29, %30, %cst_15 {dimension_numbers = #tpu.dot_dimension_numbers<[1], [0], [0], [1], [0, 0, 1, 1], [], []>} : vector<16x32xf32>, vector<32x64xf32>, vector<16x64xf32> -> vector<16x64xf32>
    %32 = vector.extract_strided_slice %31 {offsets = [0, 0], sizes = [16, 32], strides = [1, 1]} : vector<16x64xf32> to vector<16x32xf32>
    %33 = vector.shape_cast %32 : vector<16x32xf32> to vector<2x8x32xf32>
    %34 = vector.extract_strided_slice %31 {offsets = [0, 32], sizes = [16, 32], strides = [1, 1]} : vector<16x64xf32> to vector<16x32xf32>
    %35 = vector.shape_cast %34 : vector<16x32xf32> to vector<2x8x32xf32>
    %36 = tpu.iota {dimensions = array<i32: 0>} : vector<4x32xi32>
    %37 = tpu.iota {dimensions = array<i32: 1>} : vector<4x32xi32>
    %c8_i32 = arith.constant 8 : i32
    %38 = vector.broadcast %c8_i32 : i32 to vector<4x32xi32>
    %39 = arith.muli %36, %38 : vector<4x32xi32>
    %40 = arith.cmpi sge, %37, %39 : vector<4x32xi32>
    %c8_i32_16 = arith.constant 8 : i32
    %41 = vector.broadcast %c8_i32_16 : i32 to vector<4x32xi32>
    %42 = arith.addi %39, %41 : vector<4x32xi32>
    %43 = arith.cmpi slt, %37, %42 : vector<4x32xi32>
    %44 = arith.andi %40, %43 : vector<4x32xi1>
    %45 = arith.extui %44 : vector<4x32xi1> to vector<4x32xi32>
    %46 = arith.sitofp %45 : vector<4x32xi32> to vector<4x32xf32>
    %47 = vector.shape_cast %28 : vector<2x32xf32> to vector<2x1x32xf32>
    %48 = vector.broadcast %47 : vector<2x1x32xf32> to vector<2x8x32xf32>
    %49 = arith.mulf %33, %48 : vector<2x8x32xf32>
    %50 = vector.shape_cast %49 : vector<2x8x32xf32> to vector<16x32xf32>
    %cst_17 = arith.constant dense<0.000000e+00> : vector<16x4xf32>
    %51 = tpu.matmul %50, %46, %cst_17 {dimension_numbers = #tpu.dot_dimension_numbers<[1], [1], [0], [0], [0, 0, 1, 0], [], []>} : vector<16x32xf32>, vector<4x32xf32>, vector<16x4xf32> -> vector<16x4xf32>
    %52 = vector.shape_cast %51 : vector<16x4xf32> to vector<2x8x4xf32>
    %cst_18 = arith.constant 0.353553385 : f32
    %53 = vector.broadcast %cst_18 : f32 to vector<2x8x4xf32>
    %54 = arith.mulf %52, %53 : vector<2x8x4xf32>
    %cst_19 = arith.constant dense<0xFF800000> : vector<2x4xf32>
    %55 = vector.multi_reduction <maximumf>, %54, %cst_19 [1] : vector<2x8x4xf32> to vector<2x4xf32>
    %56 = vector.shape_cast %55 : vector<2x4xf32> to vector<2x1x4xf32>
    %57 = vector.broadcast %56 : vector<2x1x4xf32> to vector<2x8x4xf32>
    %58 = arith.subf %54, %57 : vector<2x8x4xf32>
    %59 = math.exp %58 : vector<2x8x4xf32>
    %cst_20 = arith.constant dense<0.000000e+00> : vector<2x4xf32>
    %60 = vector.multi_reduction <add>, %59, %cst_20 [1] : vector<2x8x4xf32> to vector<2x4xf32>
    %61 = vector.shape_cast %60 : vector<2x4xf32> to vector<2x1x4xf32>
    %62 = vector.broadcast %61 : vector<2x1x4xf32> to vector<2x8x4xf32>
    %63 = arith.divf %59, %62 : vector<2x8x4xf32>
    %64 = vector.shape_cast %63 : vector<2x8x4xf32> to vector<16x4xf32>
    %cst_21 = arith.constant dense<0.000000e+00> : vector<16x32xf32>
    %65 = tpu.matmul %64, %46, %cst_21 {dimension_numbers = #tpu.dot_dimension_numbers<[1], [0], [0], [1], [0, 0, 1, 1], [], []>} : vector<16x4xf32>, vector<4x32xf32>, vector<16x32xf32> -> vector<16x32xf32>
    %66 = vector.shape_cast %65 : vector<16x32xf32> to vector<2x8x32xf32>
    %67 = arith.mulf %66, %35 : vector<2x8x32xf32>
    %cst_22 = arith.constant dense<0.000000e+00> : vector<2x32xf32>
    %68 = vector.multi_reduction <add>, %67, %cst_22 [1] : vector<2x8x32xf32> to vector<2x32xf32>
    %c0_23 = arith.constant 0 : index
    %c0_24 = arith.constant 0 : index
    %69 = vector.load %arg6[%c0_23, %c0_24] : memref<32x32xf32, #tpu.memory_space<vmem>>, vector<32x32xf32>
    %cst_25 = arith.constant dense<0.000000e+00> : vector<2x32xf32>
    %70 = tpu.matmul %68, %69, %cst_25 {dimension_numbers = #tpu.dot_dimension_numbers<[1], [0], [0], [1], [0, 0, 1, 1], [], []>} : vector<2x32xf32>, vector<32x32xf32>, vector<2x32xf32> -> vector<2x32xf32>
    %c0_26 = arith.constant 0 : index
    %c0_27 = arith.constant 0 : index
    %71 = vector.load %arg7[%c0_26, %c0_27] : memref<1x32xf32, #tpu.memory_space<vmem>>, vector<1x32xf32>
    %72 = vector.broadcast %71 : vector<1x32xf32> to vector<2x32xf32>
    %73 = arith.addf %70, %72 : vector<2x32xf32>
    %74 = vector.extract_strided_slice %0 {offsets = [0, 0, 0], sizes = [2, 1, 32], strides = [1, 1, 1]} : vector<2x8x32xf32> to vector<2x1x32xf32>
    %75 = vector.shape_cast %74 : vector<2x1x32xf32> to vector<2x32xf32>
    %76 = arith.addf %75, %73 : vector<2x32xf32>
    %c0_28 = arith.constant 0 : index
    %c0_29 = arith.constant 0 : index
    %77 = vector.load %arg8[%c0_28, %c0_29] : memref<2x32xf32, #tpu.memory_space<vmem>>, vector<2x32xf32>
    tpu.vector_store %arg8[%c0_28, %c0_29], %76 {strides = array<i32>} : memref<2x32xf32, #tpu.memory_space<vmem>>, vector<2x32xf32>,
    return
  }
  func.func @transform_0(%arg0: i32) -> (i32, i32, i32) {
    %c0_i32 = arith.constant 0 : i32
    %c0_i32_0 = arith.constant 0 : i32
    %c0_i32_1 = arith.constant 0 : i32
    return %arg0, %c0_i32, %c0_i32_0 : i32, i32, i32
  }
  func.func @transform_1(%arg0: i32) -> (i32, i32) {
    %c0_i32 = arith.constant 0 : i32
    %c0_i32_0 = arith.constant 0 : i32
    %c0_i32_1 = arith.constant 0 : i32
    return %c0_i32, %c0_i32_0 : i32, i32
  }
  func.func @transform_2(%arg0: i32) -> (i32, i32) {
    %c0_i32 = arith.constant 0 : i32
    %c0_i32_0 = arith.constant 0 : i32
    %c0_i32_1 = arith.constant 0 : i32
    return %c0_i32, %c0_i32_0 : i32, i32
  }
  func.func @transform_3(%arg0: i32) -> (i32, i32) {
    %c0_i32 = arith.constant 0 : i32
    %c0_i32_0 = arith.constant 0 : i32
    %c0_i32_1 = arith.constant 0 : i32
    return %c0_i32, %c0_i32_0 : i32, i32
  }
  func.func @transform_4(%arg0: i32) -> (i32, i32) {
    %c0_i32 = arith.constant 0 : i32
    %c0_i32_0 = arith.constant 0 : i32
    %c0_i32_1 = arith.constant 0 : i32
    return %c0_i32, %c0_i32_0 : i32, i32
  }
  func.func @transform_5(%arg0: i32) -> (i32, i32) {
    %c0_i32 = arith.constant 0 : i32
    %c0_i32_0 = arith.constant 0 : i32
    %c0_i32_1 = arith.constant 0 : i32
    return %c0_i32, %c0_i32_0 : i32, i32
  }
  func.func @transform_6(%arg0: i32) -> (i32, i32) {
    %c0_i32 = arith.constant 0 : i32
    %c0_i32_0 = arith.constant 0 : i32
    %c0_i32_1 = arith.constant 0 : i32
    return %c0_i32, %c0_i32_0 : i32, i32
  }
  func.func @transform_7(%arg0: i32) -> (i32, i32) {
    %c0_i32 = arith.constant 0 : i32
    %c0_i32_0 = arith.constant 0 : i32
    return %arg0, %c0_i32 : i32, i32
  }
}

module attributes {stable_mosaic.version = 11 : i64} {
  func.func @cross_attention_block_kernel(%arg0: i32, %arg1: memref<2x8x32xf32, #tpu.memory_space<vmem>>, %arg2: memref<1x32xf32, #tpu.memory_space<vmem>>, %arg3: memref<1x32xf32, #tpu.memory_space<vmem>>, %arg4: memref<32x32xf32, #tpu.memory_space<vmem>>, %arg5: memref<32x64xf32, #tpu.memory_space<vmem>>, %arg6: memref<32x32xf32, #tpu.memory_space<vmem>>, %arg7: memref<1x32xf32, #tpu.memory_space<vmem>>, %arg8: memref<2x32xf32, #tpu.memory_space<vmem>>) attributes {dimension_semantics = [#tpu.dimension_semantics<parallel>], iteration_bounds = array<i64: 1>, scalar_prefetch = 0 : i64, scratch_operands = 0 : i64, tpu.core_type = #tpu.core_type<tc>, window_params = [{transform_indices = @transform_0, window_bounds = array<i64: 2, 8, 32>}, {pipeline_mode = #tpu.pipeline_mode<synchronous>, transform_indices = @transform_1, window_bounds = array<i64: 1, 32>}, {pipeline_mode = #tpu.pipeline_mode<synchronous>, transform_indices = @transform_2, window_bounds = array<i64: 1, 32>}, {pipeline_mode = #tpu.pipeline_mode<synchronous>, transform_indices = @transform_3, window_bounds = array<i64: 32, 32>}, {pipeline_mode = #tpu.pipeline_mode<synchronous>, transform_indices = @transform_4, window_bounds = array<i64: 32, 64>}, {pipeline_mode = #tpu.pipeline_mode<synchronous>, transform_indices = @transform_5, window_bounds = array<i64: 32, 32>}, {pipeline_mode = #tpu.pipeline_mode<synchronous>, transform_indices = @transform_6, window_bounds = array<i64: 1, 32>}, {transform_indices = @transform_7, window_bounds = array<i64: 2, 32>}]} {
    %c0 = arith.constant 0 : index
    %c0_0 = arith.constant 0 : index
    %c0_1 = arith.constant 0 : index
    %0 = vector.load %arg1[%c0, %c0_0, %c0_1] : memref<2x8x32xf32, #tpu.memory_space<vmem>>, vector<2x8x32xf32>
    %cst = arith.constant dense<0.000000e+00> : vector<2x8xf32>
    %1 = vector.multi_reduction <add>, %0, %cst [2] : vector<2x8x32xf32> to vector<2x8xf32>
    %2 = vector.shape_cast %1 : vector<2x8xf32> to vector<2x8x1xf32>
    %cst_2 = arith.constant 3.200000e+01 : f32
    %3 = vector.broadcast %cst_2 : f32 to vector<2x8x1xf32>
    %4 = arith.divf %2, %3 : vector<2x8x1xf32>
    %5 = vector.broadcast %4 : vector<2x8x1xf32> to vector<2x8x32xf32>
    %6 = arith.subf %0, %5 : vector<2x8x32xf32>
    %7 = arith.mulf %6, %6 : vector<2x8x32xf32>
    %cst_3 = arith.constant dense<0.000000e+00> : vector<2x8xf32>
    %8 = vector.multi_reduction <add>, %7, %cst_3 [2] : vector<2x8x32xf32> to vector<2x8xf32>
    %9 = vector.shape_cast %8 : vector<2x8xf32> to vector<2x8x1xf32>
    %cst_4 = arith.constant 3.200000e+01 : f32
    %10 = vector.broadcast %cst_4 : f32 to vector<2x8x1xf32>
    %11 = arith.divf %9, %10 : vector<2x8x1xf32>
    %cst_5 = arith.constant 9.99999974E-6 : f32
    %12 = vector.broadcast %cst_5 : f32 to vector<2x8x1xf32>
    %13 = arith.addf %11, %12 : vector<2x8x1xf32>
    %14 = math.rsqrt %13 : vector<2x8x1xf32>
    %15 = vector.broadcast %14 : vector<2x8x1xf32> to vector<2x8x32xf32>
    %16 = arith.mulf %6, %15 : vector<2x8x32xf32>
    %c0_6 = arith.constant 0 : index
    %c0_7 = arith.constant 0 : index
    %17 = vector.load %arg2[%c0_6, %c0_7] : memref<1x32xf32, #tpu.memory_space<vmem>>, vector<1x32xf32>
    %18 = vector.shape_cast %17 : vector<1x32xf32> to vector<1x1x32xf32>
    %19 = vector.broadcast %18 : vector<1x1x32xf32> to vector<2x8x32xf32>
    %20 = arith.mulf %16, %19 : vector<2x8x32xf32>
    %c0_8 = arith.constant 0 : index
    %c0_9 = arith.constant 0 : index
    %21 = vector.load %arg3[%c0_8, %c0_9] : memref<1x32xf32, #tpu.memory_space<vmem>>, vector<1x32xf32>
    %22 = vector.shape_cast %21 : vector<1x32xf32> to vector<1x1x32xf32>
    %23 = vector.broadcast %22 : vector<1x1x32xf32> to vector<2x8x32xf32>
    %24 = arith.addf %20, %23 : vector<2x8x32xf32>
    %25 = vector.extract_strided_slice %24 {offsets = [0, 0, 0], sizes = [2, 1, 32], strides = [1, 1, 1]} : vector<2x8x32xf32> to vector<2x1x32xf32>
    %26 = vector.shape_cast %25 : vector<2x1x32xf32> to vector<2x32xf32>
    %c0_10 = arith.constant 0 : index
    %c0_11 = arith.constant 0 : index
    %27 = vector.load %arg4[%c0_10, %c0_11] : memref<32x32xf32, #tpu.memory_space<vmem>>, vector<32x32xf32>
    %cst_12 = arith.constant dense<0.000000e+00> : vector<2x32xf32>
    %28 = tpu.matmul %26, %27, %cst_12 {dimension_numbers = #tpu.dot_dimension_numbers<[1], [0], [0], [1], [0, 0, 1, 1], [], []>} : vector<2x32xf32>, vector<32x32xf32>, vector<2x32xf32> -> vector<2x32xf32>
    %29 = vector.shape_cast %24 : vector<2x8x32xf32> to vector<16x32xf32>
    %c0_13 = arith.constant 0 : index
    %c0_14 = arith.constant 0 : index
    %30 = vector.load %arg5[%c0_13, %c0_14] : memref<32x64xf32, #tpu.memory_space<vmem>>, vector<32x64xf32>
    %cst_15 = arith.constant dense<0.000000e+00> : vector<16x64xf32>
    %31 = tpu.matmul %29, %30, %cst_15 {dimension_numbers = #tpu.dot_dimension_numbers<[1], [0], [0], [1], [0, 0, 1, 1], [], []>} : vector<16x32xf32>, vector<32x64xf32>, vector<16x64xf32> -> vector<16x64xf32>
    %32 = vector.extract_strided_slice %31 {offsets = [0, 0], sizes = [16, 32], strides = [1, 1]} : vector<16x64xf32> to vector<16x32xf32>
    %33 = vector.shape_cast %32 : vector<16x32xf32> to vector<2x8x32xf32>
    %34 = vector.extract_strided_slice %31 {offsets = [0, 32], sizes = [16, 32], strides = [1, 1]} : vector<16x64xf32> to vector<16x32xf32>
    %35 = vector.shape_cast %34 : vector<16x32xf32> to vector<2x8x32xf32>
    %36 = tpu.iota {dimensions = array<i32: 0>} : vector<4x32xi32>
    %37 = tpu.iota {dimensions = array<i32: 1>} : vector<4x32xi32>
    %c8_i32 = arith.constant 8 : i32
    %38 = vector.broadcast %c8_i32 : i32 to vector<4x32xi32>
    %39 = arith.muli %36, %38 : vector<4x32xi32>
    %40 = arith.cmpi sge, %37, %39 : vector<4x32xi32>
    %c8_i32_16 = arith.constant 8 : i32
    %41 = vector.broadcast %c8_i32_16 : i32 to vector<4x32xi32>
    %42 = arith.addi %39, %41 : vector<4x32xi32>
    %43 = arith.cmpi slt, %37, %42 : vector<4x32xi32>
    %44 = arith.andi %40, %43 : vector<4x32xi1>
    %45 = arith.extui %44 : vector<4x32xi1> to vector<4x32xi32>
    %46 = arith.sitofp %45 : vector<4x32xi32> to vector<4x32xf32>
    %47 = vector.shape_cast %28 : vector<2x32xf32> to vector<2x1x32xf32>
    %48 = vector.broadcast %47 : vector<2x1x32xf32> to vector<2x8x32xf32>
    %49 = arith.mulf %33, %48 : vector<2x8x32xf32>
    %50 = vector.shape_cast %49 : vector<2x8x32xf32> to vector<16x32xf32>
    %cst_17 = arith.constant dense<0.000000e+00> : vector<16x4xf32>
    %51 = tpu.matmul %50, %46, %cst_17 {dimension_numbers = #tpu.dot_dimension_numbers<[1], [1], [0], [0], [0, 0, 1, 0], [], []>} : vector<16x32xf32>, vector<4x32xf32>, vector<16x4xf32> -> vector<16x4xf32>
    %52 = vector.shape_cast %51 : vector<16x4xf32> to vector<2x8x4xf32>
    %cst_18 = arith.constant 0.353553385 : f32
    %53 = vector.broadcast %cst_18 : f32 to vector<2x8x4xf32>
    %54 = arith.mulf %52, %53 : vector<2x8x4xf32>
    %cst_19 = arith.constant dense<0xFF800000> : vector<2x4xf32>
    %55 = vector.multi_reduction <maximumf>, %54, %cst_19 [1] : vector<2x8x4xf32> to vector<2x4xf32>
    %56 = vector.shape_cast %55 : vector<2x4xf32> to vector<2x1x4xf32>
    %57 = vector.broadcast %56 : vector<2x1x4xf32> to vector<2x8x4xf32>
    %58 = arith.subf %54, %57 : vector<2x8x4xf32>
    %59 = math.exp %58 : vector<2x8x4xf32>
    %cst_20 = arith.constant dense<0.000000e+00> : vector<2x4xf32>
    %60 = vector.multi_reduction <add>, %59, %cst_20 [1] : vector<2x8x4xf32> to vector<2x4xf32>
    %61 = vector.shape_cast %60 : vector<2x4xf32> to vector<2x1x4xf32>
    %62 = vector.broadcast %61 : vector<2x1x4xf32> to vector<2x8x4xf32>
    %63 = arith.divf %59, %62 : vector<2x8x4xf32>
    %64 = vector.shape_cast %63 : vector<2x8x4xf32> to vector<16x4xf32>
    %cst_21 = arith.constant dense<0.000000e+00> : vector<16x32xf32>
    %65 = tpu.matmul %64, %46, %cst_21 {dimension_numbers = #tpu.dot_dimension_numbers<[1], [0], [0], [1], [0, 0, 1, 1], [], []>} : vector<16x4xf32>, vector<4x32xf32>, vector<16x32xf32> -> vector<16x32xf32>
    %66 = vector.shape_cast %65 : vector<16x32xf32> to vector<2x8x32xf32>
    %67 = arith.mulf %66, %35 : vector<2x8x32xf32>
    %cst_22 = arith.constant dense<0.000000e+00> : vector<2x32xf32>
    %68 = vector.multi_reduction <add>, %67, %cst_22 [1] : vector<2x8x32xf32> to vector<2x32xf32>
    %c0_23 = arith.constant 0 : index
    %c0_24 = arith.constant 0 : index
    %69 = vector.load %arg6[%c0_23, %c0_24] : memref<32x32xf32, #tpu.memory_space<vmem>>, vector<32x32xf32>
    %cst_25 = arith.constant dense<0.000000e+00> : vector<2x32xf32>
    %70 = tpu.matmul %68, %69, %cst_25 {dimension_numbers = #tpu.dot_dimension_numbers<[1], [0], [0], [1], [0, 0, 1, 1], [], []>} : vector<2x32xf32>, vector<32x32xf32>, vector<2x32xf32> -> vector<2x32xf32>
    %c0_26 = arith.constant 0 : index
    %c0_27 = arith.constant 0 : index
    %71 = vector.load %arg7[%c0_26, %c0_27] : memref<1x32xf32, #tpu.memory_space<vmem>>, vector<1x32xf32>
    %72 = vector.broadcast %71 : vector<1x32xf32> to vector<2x32xf32>
    %73 = arith.addf %70, %72 : vector<2x32xf32>
    %74 = vector.extract_strided_slice %0 {offsets = [0, 0, 0], sizes = [2, 1, 32], strides = [1, 1, 1]} : vector<2x8x32xf32> to vector<2x1x32xf32>
    %75 = vector.shape_cast %74 : vector<2x1x32xf32> to vector<2x32xf32>
    %76 = arith.addf %75, %73 : vector<2x32xf32>
    %c0_28 = arith.constant 0 : index
    %c0_29 = arith.constant 0 : index
    %77 = vector.load %arg8[%c0_28, %c0_29] : memref<2x32xf32, #tpu.memory_space<vmem>>, vector<2x32xf32>
    tpu.vector_store %arg8[%c0_28, %c0_29], %76 {strides = array<i32>} : memref<2x32xf32, #tpu.memory_space<vmem>>, vector<2x32xf32>,
    return
  }
  func.func @transform_0(%arg0: i32) -> (i32, i32, i32) {
    %c0_i32 = arith.constant 0 : i32
    %c0_i32_0 = arith.constant 0 : i32
    %c0_i32_1 = arith.constant 0 : i32
    return %arg0, %c0_i32, %c0_i32_0 : i32, i32, i32
  }
  func.func @transform_1(%arg0: i32) -> (i32, i32) {
    %c0_i32 = arith.constant 0 : i32
    %c0_i32_0 = arith.constant 0 : i32
    %c0_i32_1 = arith.constant 0 : i32
    return %c0_i32, %c0_i32_0 : i32, i32
  }
  func.func @transform_2(%arg0: i32) -> (i32, i32) {
    %c0_i32 = arith.constant 0 : i32
    %c0_i32_0 = arith.constant 0 : i32
    %c0_i32_1 = arith.constant 0 : i32
    return %c0_i32, %c0_i32_0 : i32, i32
  }
  func.func @transform_3(%arg0: i32) -> (i32, i32) {
    %c0_i32 = arith.constant 0 : i32
    %c0_i32_0 = arith.constant 0 : i32
    %c0_i32_1 = arith.constant 0 : i32
    return %c0_i32, %c0_i32_0 : i32, i32
  }
  func.func @transform_4(%arg0: i32) -> (i32, i32) {
    %c0_i32 = arith.constant 0 : i32
    %c0_i32_0 = arith.constant 0 : i32
    %c0_i32_1 = arith.constant 0 : i32
    return %c0_i32, %c0_i32_0 : i32, i32
  }
  func.func @transform_5(%arg0: i32) -> (i32, i32) {
    %c0_i32 = arith.constant 0 : i32
    %c0_i32_0 = arith.constant 0 : i32
    %c0_i32_1 = arith.constant 0 : i32
    return %c0_i32, %c0_i32_0 : i32, i32
  }
  func.func @transform_6(%arg0: i32) -> (i32, i32) {
    %c0_i32 = arith.constant 0 : i32
    %c0_i32_0 = arith.constant 0 : i32
    %c0_i32_1 = arith.constant 0 : i32
    return %c0_i32, %c0_i32_0 : i32, i32
  }
  func.func @transform_7(%arg0: i32) -> (i32, i32) {
    %c0_i32 = arith.constant 0 : i32
    %c0_i32_0 = arith.constant 0 : i32
    return %arg0, %c0_i32 : i32, i32
  }
}

</mosaic_0001>

<llo_original>
// kernel: tpu_custom_call.1
$region0: #{tpu_custom_call.1}
  #allocation0 [shape = 'u32[]', space=smem, size = 0x4, offset = 0x4, fixed_abs, tag = 'smem constant byte address 0x4 - core index']
  #allocation1 [shape = 'u32[144,128]{1,0:T(1,128)}', space=vmem, size = 0x12000, scoped, tag = 'internal scratch']
  %s0 = inlined_call_operand.hbm [shape: f32[2,8,32], index: 0, kind: input, shape index: {}]
  %s1 = inlined_call_operand.vmem [shape: f32[1,32], index: 1, kind: input, shape index: {}]
  %s2 = inlined_call_operand.vmem [shape: f32[1,32], index: 2, kind: input, shape index: {}]
  %s3 = inlined_call_operand.hbm [shape: f32[32,32], index: 3, kind: input, shape index: {}]
  %s4 = inlined_call_operand.hbm [shape: f32[32,64], index: 4, kind: input, shape index: {}]
  %s5 = inlined_call_operand.hbm [shape: f32[32,32], index: 5, kind: input, shape index: {}]
  %s6 = inlined_call_operand.vmem [shape: f32[1,32], index: 6, kind: input, shape index: {}]
  %s7 = inlined_call_operand.hbm [shape: f32[2,32], index: 7, kind: output, shape index: {}]
  %s8 = sld [smem:[#allocation0]]
  $region54: #{tpu_custom_call.1} parent=0
    _
  %s10 = ssub.s32 1, %s8
  %s11 = scalar_select 0, %s10, %s8
  $region1: #{tpu_custom_call.1} parent=0
    #allocation2 [shape = 'u8[8192]{0}', space=vmem, size = 0x2000, scoped, tag = 'input window, operand 0, single buffered']
    #allocation3 [shape = 's32[1]{0}', space=sflag, size = 0x4, scoped, tag = 'scoped memory for tpu_custom_call.1']
    #allocation4 [shape = 's32[1]{0}', space=sflag, size = 0x4, scoped, tag = 'scoped memory for tpu_custom_call.1']
    #allocation5 [shape = 'u8[16384]{0}', space=vmem, size = 0x4000, scoped, tag = 'input window, operand 3, single buffered']
    #allocation6 [shape = 's32[1]{0}', space=sflag, size = 0x4, scoped, tag = 'scoped memory for tpu_custom_call.1']
    #allocation7 [shape = 'u8[16384]{0}', space=vmem, size = 0x4000, scoped, tag = 'input window, operand 4, single buffered']
    #allocation8 [shape = 'u8[16384]{0}', space=vmem, size = 0x4000, scoped, tag = 'input window, operand 5, single buffered']
    #allocation9 [shape = 's32[1]{0}', space=sflag, size = 0x4, scoped, tag = 'scoped memory for tpu_custom_call.1']
    #allocation10 [shape = 'u8[1024]{0}', space=vmem, size = 0x400, scoped, tag = 'output window, operand 0, single buffered']
    %12 = vsyncpa [#allocation3], 0
    %13 = vsyncpa [#allocation6], 0
    %14 = vsyncpa [#allocation9], 0
    %15 = vsyncpa [#allocation4], 0
    // Predicated region
    $region2: #{tpu_custom_call.1} parent=1 // pred_check
      _
    $region3: #{tpu_custom_call.1} parent=1 // pred_check_branch
      %17 = sbr.rel (0) target = $region5
    $region4: #{tpu_custom_call.1} parent=1 // pred_region
      %s19 = ssub.s32 256, 256
      %20 = vsyncadd [#allocation3], %s19
      %s21 = sshll.u32 [#allocation2], 4
      %s22 = int_to_ptr.vmem [resolvable:$true] %s21
      %27 = dma.hbm_to_vmem [thread:$0]  %s0, 256, %s22, [#allocation3], 128, 128, 8
    $region5: #{tpu_custom_call.1} parent=1 // pred_fallthru
      _
    // Predicated region
    $region6: #{tpu_custom_call.1} parent=1 // pred_check
      _
    $region7: #{tpu_custom_call.1} parent=1 // pred_check_branch
      %29 = sbr.rel (0) target = $region9
    $region8: #{tpu_custom_call.1} parent=1 // pred_region
      _
    $region9: #{tpu_custom_call.1} parent=1 // pred_fallthru
      _
    // Predicated region
    $region10: #{tpu_custom_call.1} parent=1 // pred_check
      _
    $region11: #{tpu_custom_call.1} parent=1 // pred_check_branch
      %31 = sbr.rel (0) target = $region13
    $region12: #{tpu_custom_call.1} parent=1 // pred_region
      _
    $region13: #{tpu_custom_call.1} parent=1 // pred_fallthru
      _
    // Predicated region
    $region14: #{tpu_custom_call.1} parent=1 // pred_check
      _
    $region15: #{tpu_custom_call.1} parent=1 // pred_check_branch
      %33 = sbr.rel (0) target = $region17
    $region16: #{tpu_custom_call.1} parent=1 // pred_region
      %s35 = ssub.s32 512, 512
      %36 = vsyncadd [#allocation6], %s35
      %s37 = sshll.u32 [#allocation5], 4
      %s38 = int_to_ptr.vmem [resolvable:$true] %s37
      %43 = dma.hbm_to_vmem [thread:$0]  %s3, 512, %s38, [#allocation6], 128, 128, 8
    $region17: #{tpu_custom_call.1} parent=1 // pred_fallthru
      _
    // Predicated region
    $region18: #{tpu_custom_call.1} parent=1 // pred_check
      _
    $region19: #{tpu_custom_call.1} parent=1 // pred_check_branch
      %45 = sbr.rel (0) target = $region21
    $region20: #{tpu_custom_call.1} parent=1 // pred_region
      %s47 = ssub.s32 512, 512
      %48 = vsyncadd [#allocation6], %s47
      %s49 = sshll.u32 [#allocation7], 4
      %s50 = int_to_ptr.vmem [resolvable:$true] %s49
      %55 = dma.hbm_to_vmem [thread:$0]  %s4, 512, %s50, [#allocation6], 128, 128, 8
    $region21: #{tpu_custom_call.1} parent=1 // pred_fallthru
      _
    // Predicated region
    $region22: #{tpu_custom_call.1} parent=1 // pred_check
      _
    $region23: #{tpu_custom_call.1} parent=1 // pred_check_branch
      %57 = sbr.rel (0) target = $region25
    $region24: #{tpu_custom_call.1} parent=1 // pred_region
      %s59 = ssub.s32 512, 512
      %60 = vsyncadd [#allocation9], %s59
      %s61 = sshll.u32 [#allocation8], 4
      %s62 = int_to_ptr.vmem [resolvable:$true] %s61
      %67 = dma.hbm_to_vmem [thread:$0]  %s5, 512, %s62, [#allocation9], 128, 128, 8
    $region25: #{tpu_custom_call.1} parent=1 // pred_fallthru
      _
    // Predicated region
    $region26: #{tpu_custom_call.1} parent=1 // pred_check
      _
    $region27: #{tpu_custom_call.1} parent=1 // pred_check_branch
      %69 = sbr.rel (0) target = $region29
    $region28: #{tpu_custom_call.1} parent=1 // pred_region
      _
    $region29: #{tpu_custom_call.1} parent=1 // pred_fallthru
      _
    // Predicated region
    $region30: #{tpu_custom_call.1} parent=1 // pred_check
      _
    $region31: #{tpu_custom_call.1} parent=1 // pred_check_branch
      %71 = sbr.rel (0) target = $region33
    $region32: #{tpu_custom_call.1} parent=1 // pred_region
      %72 = dma.done [#allocation3], 256
    $region33: #{tpu_custom_call.1} parent=1 // pred_fallthru
      _
    // Predicated region
    $region34: #{tpu_custom_call.1} parent=1 // pred_check
      _
    $region35: #{tpu_custom_call.1} parent=1 // pred_check_branch
      %74 = sbr.rel (0) target = $region37
    $region36: #{tpu_custom_call.1} parent=1 // pred_region
      %75 = dma.done [#allocation6], 512
    $region37: #{tpu_custom_call.1} parent=1 // pred_fallthru
      _
    // Predicated region
    $region38: #{tpu_custom_call.1} parent=1 // pred_check
      _
    $region39: #{tpu_custom_call.1} parent=1 // pred_check_branch
      %77 = sbr.rel (0) target = $region41
    $region40: #{tpu_custom_call.1} parent=1 // pred_region
      %78 = dma.done [#allocation6], 512
    $region41: #{tpu_custom_call.1} parent=1 // pred_fallthru
      _
    // Predicated region
    $region42: #{tpu_custom_call.1} parent=1 // pred_check
      _
    $region43: #{tpu_custom_call.1} parent=1 // pred_check_branch
      %80 = sbr.rel (0) target = $region45
    $region44: #{tpu_custom_call.1} parent=1 // pred_region
      %81 = dma.done [#allocation9], 512
    $region45: #{tpu_custom_call.1} parent=1 // pred_fallthru
      _
    %v82 = vld [vmem:[#allocation2] sm:$0xff]
    %v83 = vld [vmem:[#allocation2 + $0x8] sm:$0xff]
    %vm84 = vcmask 261120
    %v85 = vsel %vm84, %v82, 0.0
    %86 = vadd.xlane.f32.xlu0 %v85
    %v87 = vpop.xlane.xlu0 %86
    %v88 = vsel %vm84, %v83, 0.0
    %89 = vadd.xlane.f32.xlu0 %v88
    %v90 = vpop.xlane.xlu0 %89
    %v91 = vrcp.pop 32.0
    %v92 = vmul.f32 %v87, %v91
    %v93 = vmul.f32 %v90, %v91
    %v94 = vsub.f32 %v82, %v92
    %v95 = vsub.f32 %v83, %v93
    %v96 = vmul.f32 %v94, %v94
    %v97 = vmul.f32 %v95, %v95
    %v98 = vsel %vm84, %v96, 0.0
    %99 = vadd.xlane.f32.xlu0 %v98
    %v100 = vpop.xlane.xlu0 %99
    %v101 = vsel %vm84, %v97, 0.0
    %102 = vadd.xlane.f32.xlu0 %v101
    %v103 = vpop.xlane.xlu0 %102
    %v104 = vmul.f32 %v100, %v91
    %v105 = vmul.f32 %v103, %v91
    %v106 = vadd.f32 %v104, 1e-05
    %v107 = vadd.f32 %v105, 1e-05
    %v108 = vrsqrt.pop %v106
    %v109 = vrsqrt.pop %v107
    %v110 = vmul.f32 %v94, %v108
    %v111 = vmul.f32 %v95, %v109
    %v112 = vld [vmem:[%s1] sm:$0x1]
    %v114 = vlaneseq
    %v115 = vshrl.u32 %v114, 7
    %v116 = vsub.s32 0, %v115
    %v117 = vrot.slane %v112, %v116
    %v119 = vmul.f32 %v110, %v117
    %v120 = vmul.f32 %v111, %v117
    %v121 = vld [vmem:[%s2] sm:$0x1]
    %v123 = vlaneseq
    %v124 = vshrl.u32 %v123, 7
    %v125 = vsub.s32 0, %v124
    %v126 = vrot.slane %v121, %v125
    %v128 = vadd.f32 %v119, %v126
    %v129 = vadd.f32 %v120, %v126
    %v130 = vld [vmem:[#allocation5] sm:$0xff]
    %v131 = vld [vmem:[#allocation5 + $0x8] sm:$0xff]
    %v132 = vld [vmem:[#allocation5 + $0x10] sm:$0xff]
    %v133 = vld [vmem:[#allocation5 + $0x18] sm:$0xff]
    %v136 = vrot.slane %v129, 7
    %vm137 = vcmask 1041409
    %v138 = vsel %vm137, %v136, %v128
    %v139 = vsel %vm84, %v138, 0
    %141 = vmatprep.subr.mxu0 0.0
    %142 = vmatpush1.msra.mxu0 %v130
    %143 = vmatprep.subr.mxu0 0.0
    %144 = vmatpush1.msra.mxu0 %v131
    %145 = vmatprep.subr.mxu0 0.0
    %146 = vmatpush1.msra.mxu0 %v132
    %147 = vmatprep.subr.mxu0 0.0
    %148 = vmatpush1.msra.mxu0 %v133
    %149 = vmatprep.subr.mxu0 0.0
    %150 = vmatpush1.msra.mxu0 0.0
    %151 = vmatprep.subr.mxu0 0.0
    %152 = vmatpush1.msra.mxu0 0.0
    %153 = vmatprep.subr.mxu0 0.0
    %154 = vmatpush1.msra.mxu0 0.0
    %155 = vmatprep.subr.mxu0 0.0
    %156 = vmatpush1.msra.mxu0 0.0
    %157 = vmatprep.subr.mxu0 0.0
    %158 = vmatpush1.msra.mxu0 0.0
    %159 = vmatprep.subr.mxu0 0.0
    %160 = vmatpush1.msra.mxu0 0.0
    %161 = vmatprep.subr.mxu0 0.0
    %162 = vmatpush1.msra.mxu0 0.0
    %163 = vmatprep.subr.mxu0 0.0
    %164 = vmatpush1.msra.mxu0 0.0
    %165 = vmatprep.subr.mxu0 0.0
    %166 = vmatpush1.msra.mxu0 0.0
    %167 = vmatprep.subr.mxu0 0.0
    %168 = vmatpush1.msra.mxu0 0.0
    %169 = vmatprep.subr.mxu0 0.0
    %170 = vmatpush1.msra.mxu0 0.0
    %171 = vmatprep.subr.mxu0 0.0
    %172 = vmatpush1.msra.mxu0 0.0
    %173 = vmatprep.subr.mxu0 0.0
    %174 = vmatpush1.msra.mxu0 0.0
    %175 = vmatprep.subr.mxu0 0.0
    %176 = vmatpush1.msra.mxu0 0.0
    %177 = vmatprep.subr.mxu0 0.0
    %178 = vmatpush1.msra.mxu0 0.0
    %179 = vmatprep.subr.mxu0 0.0
    %180 = vmatpush1.msra.mxu0 0.0
    %181 = vmatprep.subr.mxu0 0.0
    %182 = vmatpush1.msra.mxu0 0.0
    %183 = vmatprep.subr.mxu0 0.0
    %184 = vmatpush1.msra.mxu0 0.0
    %185 = vmatprep.subr.mxu0 0.0
    %186 = vmatpush1.msra.mxu0 0.0
    %187 = vmatprep.subr.mxu0 0.0
    %188 = vmatpush1.msra.mxu0 0.0
    %189 = vmatprep.subr.mxu0 0.0
    %190 = vmatpush1.msra.mxu0 0.0
    %191 = vmatprep.subr.mxu0 0.0
    %192 = vmatpush1.msra.mxu0 0.0
    %193 = vmatprep.subr.mxu0 0.0
    %194 = vmatpush1.msra.mxu0 0.0
    %195 = vmatprep.subr.mxu0 0.0
    %196 = vmatpush1.msra.mxu0 0.0
    %197 = vmatprep.subr.mxu0 0.0
    %198 = vmatpush1.msra.mxu0 0.0
    %199 = vmatprep.subr.mxu0 0.0
    %200 = vmatpush1.msra.mxu0 0.0
    %201 = vmatprep.subr.mxu0 0.0
    %202 = vmatpush1.msra.mxu0 0.0
    %203 = vmatprep.subr.mxu0 0.0
    %204 = vmatpush1.msra.mxu0 0.0
    %205 = vmatprep.mubr.f32.mxu0 0.0
    %206 = vmatmul.mubr.f32.gmra.mrb[0].mxu0 %v139
    %v207 = vpop.f32.mrb[0].mxu0
    %v208 = vadd.f32 0.0, %v207
    %v209 = vpop.f32.mrb[0].mxu0
    %210 = vdwg.mxu0
    %v211 = vld [vmem:[#allocation7] sm:$0xff]
    %v212 = vld [vmem:[#allocation7 + $0x8] sm:$0xff]
    %v213 = vld [vmem:[#allocation7 + $0x10] sm:$0xff]
    %v214 = vld [vmem:[#allocation7 + $0x18] sm:$0xff]
    %v215 = vsel %vm84, %v128, 0
    %v217 = vsel %vm84, %v129, 0
    %219 = vmatprep.subr.mxu0 0.0
    %220 = vmatpush1.msra.mxu0 %v211
    %221 = vmatprep.subr.mxu0 0.0
    %222 = vmatpush1.msra.mxu0 %v212
    %223 = vmatprep.subr.mxu0 0.0
    %224 = vmatpush1.msra.mxu0 %v213
    %225 = vmatprep.subr.mxu0 0.0
    %226 = vmatpush1.msra.mxu0 %v214
    %227 = vmatprep.subr.mxu0 0.0
    %228 = vmatpush1.msra.mxu0 0.0
    %229 = vmatprep.subr.mxu0 0.0
    %230 = vmatpush1.msra.mxu0 0.0
    %231 = vmatprep.subr.mxu0 0.0
    %232 = vmatpush1.msra.mxu0 0.0
    %233 = vmatprep.subr.mxu0 0.0
    %234 = vmatpush1.msra.mxu0 0.0
    %235 = vmatprep.subr.mxu0 0.0
    %236 = vmatpush1.msra.mxu0 0.0
    %237 = vmatprep.subr.mxu0 0.0
    %238 = vmatpush1.msra.mxu0 0.0
    %239 = vmatprep.subr.mxu0 0.0
    %240 = vmatpush1.msra.mxu0 0.0
    %241 = vmatprep.subr.mxu0 0.0
    %242 = vmatpush1.msra.mxu0 0.0
    %243 = vmatprep.subr.mxu0 0.0
    %244 = vmatpush1.msra.mxu0 0.0
    %245 = vmatprep.subr.mxu0 0.0
    %246 = vmatpush1.msra.mxu0 0.0
    %247 = vmatprep.subr.mxu0 0.0
    %248 = vmatpush1.msra.mxu0 0.0
    %249 = vmatprep.subr.mxu0 0.0
    %250 = vmatpush1.msra.mxu0 0.0
    %251 = vmatprep.subr.mxu0 0.0
    %252 = vmatpush1.msra.mxu0 0.0
    %253 = vmatprep.subr.mxu0 0.0
    %254 = vmatpush1.msra.mxu0 0.0
    %255 = vmatprep.subr.mxu0 0.0
    %256 = vmatpush1.msra.mxu0 0.0
    %257 = vmatprep.subr.mxu0 0.0
    %258 = vmatpush1.msra.mxu0 0.0
    %259 = vmatprep.subr.mxu0 0.0
    %260 = vmatpush1.msra.mxu0 0.0
    %261 = vmatprep.subr.mxu0 0.0
    %262 = vmatpush1.msra.mxu0 0.0
    %263 = vmatprep.subr.mxu0 0.0
    %264 = vmatpush1.msra.mxu0 0.0
    %265 = vmatprep.subr.mxu0 0.0
    %266 = vmatpush1.msra.mxu0 0.0
    %267 = vmatprep.subr.mxu0 0.0
    %268 = vmatpush1.msra.mxu0 0.0
    %269 = vmatprep.subr.mxu0 0.0
    %270 = vmatpush1.msra.mxu0 0.0
    %271 = vmatprep.subr.mxu0 0.0
    %272 = vmatpush1.msra.mxu0 0.0
    %273 = vmatprep.subr.mxu0 0.0
    %274 = vmatpush1.msra.mxu0 0.0
    %275 = vmatprep.subr.mxu0 0.0
    %276 = vmatpush1.msra.mxu0 0.0
    %277 = vmatprep.subr.mxu0 0.0
    %278 = vmatpush1.msra.mxu0 0.0
    %279 = vmatprep.subr.mxu0 0.0
    %280 = vmatpush1.msra.mxu0 0.0
    %281 = vmatprep.subr.mxu0 0.0
    %282 = vmatpush1.msra.mxu0 0.0
    %283 = vmatprep.mubr.f32.mxu0 0.0
    %284 = vmatmul.mubr.f32.gmra.mrb[0].mxu0 %v215
    %v285 = vpop.f32.mrb[0].mxu0
    %v286 = vadd.f32 0.0, %v285
    %v287 = vpop.f32.mrb[0].mxu0
    %288 = vmatprep.mubr.f32.mxu0 0.0
    %289 = vmatmul.mubr.f32.gmra.mrb[0].mxu0 %v217
    %v290 = vpop.f32.mrb[0].mxu0
    %v291 = vadd.f32 0.0, %v290
    %v292 = vpop.f32.mrb[0].mxu0
    %293 = vdwg.mxu0
    %v294 = vlaneseq
    %v295 = vshrl.u32 %v294, 7
    %v296 = vlaneseq
    %v297 = vand.u32 %v296, 127
    %v298 = vmul.u32 %v295, 8
    %vm299 = vcmp.ge.s32.totalorder %v297, %v298
    %v300 = vadd.s32 %v298, 8
    %vm301 = vcmp.lt.s32.totalorder %v297, %v300
    %vm302 = vmand %vm299, %vm301
    %v303 = vsel %vm302, 1, 0
    %v304 = vcvt.s32.f32 %v303
    %v307 = vunpack.c.l.s4 1966171168
    %v308 = vunpack.c.0.s8 %v307
    %v309 = vlaneseq
    %v310 = vshrl.u32 %v309, 7
    %v311 = vsub.s32 %v308, %v310
    %v312 = vrot.slane %v208, %v311
    %v313 = vcombine.high %v312, %v312
    %v315 = vunpack.c.l.s4 1966171168
    %v316 = vunpack.c.0.s8 %v315
    %v317 = vlaneseq
    %v318 = vshrl.u32 %v317, 7
    %v319 = vsub.s32 %v316, %v318
    %v320 = vrot.slane %v312, %v319
    %v322 = vunpack.c.l.s4 1966171168
    %v323 = vunpack.c.0.s8 %v322
    %v324 = vlaneseq
    %v325 = vshrl.u32 %v324, 7
    %v326 = vsub.s32 %v323, %v325
    %v327 = vrot.slane %v313, %v326
    %v328 = vlaneseq
    %v329 = vshrl.u32 %v328, 7
    %v330 = vsub.s32 0, %v329
    %v331 = vrot.slane %v320, %v330
    %v332 = vlaneseq
    %v333 = vshrl.u32 %v332, 7
    %v334 = vsub.s32 0, %v333
    %v335 = vrot.slane %v327, %v334
    %v338 = vmul.f32 %v286, %v331
    %v339 = vmul.f32 %v291, %v335
    %v341 = vsel %vm84, %v338, 0
    %v344 = vsel %vm84, %v339, 0
    %v347 = vsel %vm84, %v304, 0
    %349 = vmatprep.subr.mxu0 0.0
    %350 = vmatpush1.xpose.msra.mxu0 %v347
    %351 = vmatprep.subr.mxu0 0.0
    %352 = vmatpush1.xpose.msra.mxu0 0.0
    %353 = vmatprep.subr.mxu0 0.0
    %354 = vmatpush1.xpose.msra.mxu0 0.0
    %355 = vmatprep.subr.mxu0 0.0
    %356 = vmatpush1.xpose.msra.mxu0 0.0
    %357 = vmatprep.subr.mxu0 0.0
    %358 = vmatpush1.xpose.msra.mxu0 0.0
    %359 = vmatprep.subr.mxu0 0.0
    %360 = vmatpush1.xpose.msra.mxu0 0.0
    %361 = vmatprep.subr.mxu0 0.0
    %362 = vmatpush1.xpose.msra.mxu0 0.0
    %363 = vmatprep.subr.mxu0 0.0
    %364 = vmatpush1.xpose.msra.mxu0 0.0
    %365 = vmatprep.subr.mxu0 0.0
    %366 = vmatpush1.xpose.msra.mxu0 0.0
    %367 = vmatprep.subr.mxu0 0.0
    %368 = vmatpush1.xpose.msra.mxu0 0.0
    %369 = vmatprep.subr.mxu0 0.0
    %370 = vmatpush1.xpose.msra.mxu0 0.0
    %371 = vmatprep.subr.mxu0 0.0
    %372 = vmatpush1.xpose.msra.mxu0 0.0
    %373 = vmatprep.subr.mxu0 0.0
    %374 = vmatpush1.xpose.msra.mxu0 0.0
    %375 = vmatprep.subr.mxu0 0.0
    %376 = vmatpush1.xpose.msra.mxu0 0.0
    %377 = vmatprep.subr.mxu0 0.0
    %378 = vmatpush1.xpose.msra.mxu0 0.0
    %379 = vmatprep.subr.mxu0 0.0
    %380 = vmatpush1.xpose.msra.mxu0 0.0
    %381 = vmatprep.subr.mxu0 0.0
    %382 = vmatpush1.xpose.msra.mxu0 0.0
    %383 = vmatprep.subr.mxu0 0.0
    %384 = vmatpush1.xpose.msra.mxu0 0.0
    %385 = vmatprep.subr.mxu0 0.0
    %386 = vmatpush1.xpose.msra.mxu0 0.0
    %387 = vmatprep.subr.mxu0 0.0
    %388 = vmatpush1.xpose.msra.mxu0 0.0
    %389 = vmatprep.subr.mxu0 0.0
    %390 = vmatpush1.xpose.msra.mxu0 0.0
    %391 = vmatprep.subr.mxu0 0.0
    %392 = vmatpush1.xpose.msra.mxu0 0.0
    %393 = vmatprep.subr.mxu0 0.0
    %394 = vmatpush1.xpose.msra.mxu0 0.0
    %395 = vmatprep.subr.mxu0 0.0
    %396 = vmatpush1.xpose.msra.mxu0 0.0
    %397 = vmatprep.subr.mxu0 0.0
    %398 = vmatpush1.xpose.msra.mxu0 0.0
    %399 = vmatprep.subr.mxu0 0.0
    %400 = vmatpush1.xpose.msra.mxu0 0.0
    %401 = vmatprep.subr.mxu0 0.0
    %402 = vmatpush1.xpose.msra.mxu0 0.0
    %403 = vmatprep.subr.mxu0 0.0
    %404 = vmatpush1.xpose.msra.mxu0 0.0
    %405 = vmatprep.subr.mxu0 0.0
    %406 = vmatpush1.xpose.msra.mxu0 0.0
    %407 = vmatprep.subr.mxu0 0.0
    %408 = vmatpush1.xpose.msra.mxu0 0.0
    %409 = vmatprep.subr.mxu0 0.0
    %410 = vmatpush1.xpose.msra.mxu0 0.0
    %411 = vmatprep.subr.mxu0 0.0
    %412 = vmatpush1.xpose.msra.mxu0 0.0
    %413 = vmatprep.mubr.f32.mxu0 0.0
    %414 = vmatmul.mubr.f32.gmra.mrb[0].mxu0 %v341
    %v415 = vpop.f32.mrb[0].mxu0
    %v416 = vadd.f32 0.0, %v415
    %v417 = vpop.f32.mrb[0].mxu0
    %418 = vmatprep.mubr.f32.mxu0 0.0
    %419 = vmatmul.mubr.f32.gmra.mrb[0].mxu0 %v344
    %v420 = vpop.f32.mrb[0].mxu0
    %v421 = vadd.f32 0.0, %v420
    %v422 = vpop.f32.mrb[0].mxu0
    %423 = vdwg.mxu0
    %v424 = vmul.f32 %v416, 0.35355338
    %v425 = vmul.f32 %v421, 0.35355338
    %vm426 = vcmask 31744
    %v427 = vsel %vm426, %v424, -inf
    %v428 = vrot.slane %v427, 4
    %v429 = vmax.f32 %v427, %v428
    %v430 = vrot.slane %v429, 2
    %v431 = vmax.f32 %v429, %v430
    %v432 = vrot.slane %v431, 1
    %v433 = vmax.f32 %v431, %v432
    %v434 = vsel %vm426, %v425, -inf
    %v435 = vrot.slane %v434, 4
    %v436 = vmax.f32 %v434, %v435
    %v437 = vrot.slane %v436, 2
    %v438 = vmax.f32 %v436, %v437
    %v439 = vrot.slane %v438, 1
    %v440 = vmax.f32 %v438, %v439
    %v441 = vsub.f32 %v424, %v433
    %v442 = vsub.f32 %v425, %v440
    %v443 = vmul.f32 %v441, 1.442695
    %v444 = vpow.pop %v443
    %v445 = vmul.f32 %v442, 1.442695
    %v446 = vpow.pop %v445
    %v447 = vsel %vm426, %v444, 0.0
    %v448 = vrot.slane %v447, 4
    %v449 = vadd.f32 %v447, %v448
    %v450 = vrot.slane %v449, 2
    %v451 = vadd.f32 %v449, %v450
    %v452 = vrot.slane %v451, 1
    %v453 = vadd.f32 %v451, %v452
    %v454 = vsel %vm426, %v446, 0.0
    %v455 = vrot.slane %v454, 4
    %v456 = vadd.f32 %v454, %v455
    %v457 = vrot.slane %v456, 2
    %v458 = vadd.f32 %v456, %v457
    %v459 = vrot.slane %v458, 1
    %v460 = vadd.f32 %v458, %v459
    %v461 = vrcp.pop %v453
    %v462 = vmul.f32 %v444, %v461
    %v463 = vrcp.pop %v460
    %v464 = vmul.f32 %v446, %v463
    %v466 = vsel %vm426, %v462, 0
    %v469 = vsel %vm426, %v464, 0
    %vm471 = vcmask 1043456
    %v472 = vsel %vm471, %v304, 0
    %474 = vmatprep.subr.mxu0 0.0
    %475 = vmatpush1.msra.mxu0 %v472
    %476 = vmatprep.subr.mxu0 0.0
    %477 = vmatpush1.msra.mxu0 0.0
    %478 = vmatprep.subr.mxu0 0.0
    %479 = vmatpush1.msra.mxu0 0.0
    %480 = vmatprep.subr.mxu0 0.0
    %481 = vmatpush1.msra.mxu0 0.0
    %482 = vmatprep.subr.mxu0 0.0
    %483 = vmatpush1.msra.mxu0 0.0
    %484 = vmatprep.subr.mxu0 0.0
    %485 = vmatpush1.msra.mxu0 0.0
    %486 = vmatprep.subr.mxu0 0.0
    %487 = vmatpush1.msra.mxu0 0.0
    %488 = vmatprep.subr.mxu0 0.0
    %489 = vmatpush1.msra.mxu0 0.0
    %490 = vmatprep.subr.mxu0 0.0
    %491 = vmatpush1.msra.mxu0 0.0
    %492 = vmatprep.subr.mxu0 0.0
    %493 = vmatpush1.msra.mxu0 0.0
    %494 = vmatprep.subr.mxu0 0.0
    %495 = vmatpush1.msra.mxu0 0.0
    %496 = vmatprep.subr.mxu0 0.0
    %497 = vmatpush1.msra.mxu0 0.0
    %498 = vmatprep.subr.mxu0 0.0
    %499 = vmatpush1.msra.mxu0 0.0
    %500 = vmatprep.subr.mxu0 0.0
    %501 = vmatpush1.msra.mxu0 0.0
    %502 = vmatprep.subr.mxu0 0.0
    %503 = vmatpush1.msra.mxu0 0.0
    %504 = vmatprep.subr.mxu0 0.0
    %505 = vmatpush1.msra.mxu0 0.0
    %506 = vmatprep.subr.mxu0 0.0
    %507 = vmatpush1.msra.mxu0 0.0
    %508 = vmatprep.subr.mxu0 0.0
    %509 = vmatpush1.msra.mxu0 0.0
    %510 = vmatprep.subr.mxu0 0.0
    %511 = vmatpush1.msra.mxu0 0.0
    %512 = vmatprep.subr.mxu0 0.0
    %513 = vmatpush1.msra.mxu0 0.0
    %514 = vmatprep.subr.mxu0 0.0
    %515 = vmatpush1.msra.mxu0 0.0
    %516 = vmatprep.subr.mxu0 0.0
    %517 = vmatpush1.msra.mxu0 0.0
    %518 = vmatprep.subr.mxu0 0.0
    %519 = vmatpush1.msra.mxu0 0.0
    %520 = vmatprep.subr.mxu0 0.0
    %521 = vmatpush1.msra.mxu0 0.0
    %522 = vmatprep.subr.mxu0 0.0
    %523 = vmatpush1.msra.mxu0 0.0
    %524 = vmatprep.subr.mxu0 0.0
    %525 = vmatpush1.msra.mxu0 0.0
    %526 = vmatprep.subr.mxu0 0.0
    %527 = vmatpush1.msra.mxu0 0.0
    %528 = vmatprep.subr.mxu0 0.0
    %529 = vmatpush1.msra.mxu0 0.0
    %530 = vmatprep.subr.mxu0 0.0
    %531 = vmatpush1.msra.mxu0 0.0
    %532 = vmatprep.subr.mxu0 0.0
    %533 = vmatpush1.msra.mxu0 0.0
    %534 = vmatprep.subr.mxu0 0.0
    %535 = vmatpush1.msra.mxu0 0.0
    %536 = vmatprep.subr.mxu0 0.0
    %537 = vmatpush1.msra.mxu0 0.0
    %538 = vmatprep.mubr.f32.mxu0 0.0
    %539 = vmatmul.mubr.f32.gmra.mrb[0].mxu0 %v466
    %v540 = vpop.f32.mrb[0].mxu0
    %v541 = vadd.f32 0.0, %v540
    %v542 = vpop.f32.mrb[0].mxu0
    %543 = vmatprep.mubr.f32.mxu0 0.0
    %544 = vmatmul.mubr.f32.gmra.mrb[0].mxu0 %v469
    %v545 = vpop.f32.mrb[0].mxu0
    %v546 = vadd.f32 0.0, %v545
    %v547 = vpop.f32.mrb[0].mxu0
    %548 = vdwg.mxu0
    %551 = vrot.lane.b32.xlu0 %v286, 96
    %v552 = vpop.permute.xlu0 %551
    %553 = vrot.lane.b32.xlu0 %v291, 96
    %v554 = vpop.permute.xlu0 %553
    %v557 = vmul.f32 %v541, %v552
    %v558 = vmul.f32 %v546, %v554
    %v559 = vsel %vm84, %v557, 0.0
    %v560 = vrot.slane %v559, 4
    %v561 = vadd.f32 %v559, %v560
    %v562 = vrot.slane %v561, 2
    %v563 = vadd.f32 %v561, %v562
    %v564 = vrot.slane %v563, 1
    %v565 = vadd.f32 %v563, %v564
    %v566 = vsel %vm84, %v558, 0.0
    %v567 = vrot.slane %v566, 4
    %v568 = vadd.f32 %v566, %v567
    %v569 = vrot.slane %v568, 2
    %v570 = vadd.f32 %v568, %v569
    %v571 = vrot.slane %v570, 1
    %v572 = vadd.f32 %v570, %v571
    %v573 = vld [vmem:[#allocation8] sm:$0xff]
    %v574 = vld [vmem:[#allocation8 + $0x8] sm:$0xff]
    %v575 = vld [vmem:[#allocation8 + $0x10] sm:$0xff]
    %v576 = vld [vmem:[#allocation8 + $0x18] sm:$0xff]
    %v577 = vld [vmem:[%s6] sm:$0x1]
    %v579 = vlaneseq
    %v580 = vshrl.u32 %v579, 7
    %v581 = vsub.s32 0, %v580
    %v582 = vrot.slane %v577, %v581
    %v586 = vsel %vm137, %v572, %v565
    %v587 = vsel %vm84, %v586, 0
    %589 = vmatprep.subr.mxu0 0.0
    %590 = vmatpush1.msra.mxu0 %v573
    %591 = vmatprep.subr.mxu0 0.0
    %592 = vmatpush1.msra.mxu0 %v574
    %593 = vmatprep.subr.mxu0 0.0
    %594 = vmatpush1.msra.mxu0 %v575
    %595 = vmatprep.subr.mxu0 0.0
    %596 = vmatpush1.msra.mxu0 %v576
    %597 = vmatprep.subr.mxu0 0.0
    %598 = vmatpush1.msra.mxu0 0.0
    %599 = vmatprep.subr.mxu0 0.0
    %600 = vmatpush1.msra.mxu0 0.0
    %601 = vmatprep.subr.mxu0 0.0
    %602 = vmatpush1.msra.mxu0 0.0
    %603 = vmatprep.subr.mxu0 0.0
    %604 = vmatpush1.msra.mxu0 0.0
    %605 = vmatprep.subr.mxu0 0.0
    %606 = vmatpush1.msra.mxu0 0.0
    %607 = vmatprep.subr.mxu0 0.0
    %608 = vmatpush1.msra.mxu0 0.0
    %609 = vmatprep.subr.mxu0 0.0
    %610 = vmatpush1.msra.mxu0 0.0
    %611 = vmatprep.subr.mxu0 0.0
    %612 = vmatpush1.msra.mxu0 0.0
    %613 = vmatprep.subr.mxu0 0.0
    %614 = vmatpush1.msra.mxu0 0.0
    %615 = vmatprep.subr.mxu0 0.0
    %616 = vmatpush1.msra.mxu0 0.0
    %617 = vmatprep.subr.mxu0 0.0
    %618 = vmatpush1.msra.mxu0 0.0
    %619 = vmatprep.subr.mxu0 0.0
    %620 = vmatpush1.msra.mxu0 0.0
    %621 = vmatprep.subr.mxu0 0.0
    %622 = vmatpush1.msra.mxu0 0.0
    %623 = vmatprep.subr.mxu0 0.0
    %624 = vmatpush1.msra.mxu0 0.0
    %625 = vmatprep.subr.mxu0 0.0
    %626 = vmatpush1.msra.mxu0 0.0
    %627 = vmatprep.subr.mxu0 0.0
    %628 = vmatpush1.msra.mxu0 0.0
    %629 = vmatprep.subr.mxu0 0.0
    %630 = vmatpush1.msra.mxu0 0.0
    %631 = vmatprep.subr.mxu0 0.0
    %632 = vmatpush1.msra.mxu0 0.0
    %633 = vmatprep.subr.mxu0 0.0
    %634 = vmatpush1.msra.mxu0 0.0
    %635 = vmatprep.subr.mxu0 0.0
    %636 = vmatpush1.msra.mxu0 0.0
    %637 = vmatprep.subr.mxu0 0.0
    %638 = vmatpush1.msra.mxu0 0.0
    %639 = vmatprep.subr.mxu0 0.0
    %640 = vmatpush1.msra.mxu0 0.0
    %641 = vmatprep.subr.mxu0 0.0
    %642 = vmatpush1.msra.mxu0 0.0
    %643 = vmatprep.subr.mxu0 0.0
    %644 = vmatpush1.msra.mxu0 0.0
    %645 = vmatprep.subr.mxu0 0.0
    %646 = vmatpush1.msra.mxu0 0.0
    %647 = vmatprep.subr.mxu0 0.0
    %648 = vmatpush1.msra.mxu0 0.0
    %649 = vmatprep.subr.mxu0 0.0
    %650 = vmatpush1.msra.mxu0 0.0
    %651 = vmatprep.subr.mxu0 0.0
    %652 = vmatpush1.msra.mxu0 0.0
    %653 = vmatprep.mubr.f32.mxu0 0.0
    %654 = vmatmul.mubr.f32.gmra.mrb[0].mxu0 %v587
    %v655 = vpop.f32.mrb[0].mxu0
    %v656 = vadd.f32 %v582, %v655
    %v657 = vpop.f32.mrb[0].mxu0
    %658 = vdwg.mxu0
    %v660 = vrot.slane %v656, 1
    %v663 = vadd.f32 %v82, %v656
    %v664 = vadd.f32 %v83, %v660
    %v667 = vrot.slane %v664, 7
    %v668 = vsel %vm137, %v667, %v663
    %vm670 = vcmask 254976
    %671 = vst.msk [vmem:[#allocation10] sm:$0x3] %vm670, %v668
    // Predicated region
    $region46: #{tpu_custom_call.1} parent=1 // pred_check
      _
    $region47: #{tpu_custom_call.1} parent=1 // pred_check_branch
      %673 = sbr.rel (0) target = $region49
    $region48: #{tpu_custom_call.1} parent=1 // pred_region
      %s675 = ssub.s32 32, 32
      %676 = vsyncadd [#allocation4], %s675
      %s678 = sshll.u32 [#allocation10], 4
      %s679 = int_to_ptr.vmem [resolvable:$true] %s678
      %681 = dma.vmem_to_hbm [thread:$0]  %s679, 32, %s7, [#allocation4]
    $region49: #{tpu_custom_call.1} parent=1 // pred_fallthru
      _
    // Predicated region
    $region50: #{tpu_custom_call.1} parent=1 // pred_check
      _
    $region51: #{tpu_custom_call.1} parent=1 // pred_check_branch
      %683 = sbr.rel (0) target = $region53
    $region52: #{tpu_custom_call.1} parent=1 // pred_region
      %684 = dma.done [#allocation4], 32
    $region53: #{tpu_custom_call.1} parent=1 // pred_fallthru
      _
    %685 = vsyncpa [#allocation3], 1
    %686 = vsyncpa [#allocation6], 1
    %687 = vsyncpa [#allocation9], 1
    %688 = vsyncpa [#allocation4], 1

// kernel: tpu_custom_call.1
$region0: #{tpu_custom_call.1}
  #allocation0 [shape = 'u32[]', space=smem, size = 0x4, offset = 0x4, fixed_abs, tag = 'smem constant byte address 0x4 - core index']
  #allocation1 [shape = 'u32[144,128]{1,0:T(1,128)}', space=vmem, size = 0x12000, scoped, tag = 'internal scratch']
  %s0 = inlined_call_operand.hbm [shape: f32[2,8,32], index: 0, kind: input, shape index: {}]
  %s1 = inlined_call_operand.vmem [shape: f32[1,32], index: 1, kind: input, shape index: {}]
  %s2 = inlined_call_operand.vmem [shape: f32[1,32], index: 2, kind: input, shape index: {}]
  %s3 = inlined_call_operand.hbm [shape: f32[32,32], index: 3, kind: input, shape index: {}]
  %s4 = inlined_call_operand.hbm [shape: f32[32,64], index: 4, kind: input, shape index: {}]
  %s5 = inlined_call_operand.hbm [shape: f32[32,32], index: 5, kind: input, shape index: {}]
  %s6 = inlined_call_operand.vmem [shape: f32[1,32], index: 6, kind: input, shape index: {}]
  %s7 = inlined_call_operand.hbm [shape: f32[2,32], index: 7, kind: output, shape index: {}]
  %s8 = sld [smem:[#allocation0]]
  $region54: #{tpu_custom_call.1} parent=0
    _
  %s10 = ssub.s32 1, %s8
  %s11 = scalar_select 0, %s10, %s8
  $region1: #{tpu_custom_call.1} parent=0
    #allocation2 [shape = 'u8[8192]{0}', space=vmem, size = 0x2000, scoped, tag = 'input window, operand 0, single buffered']
    #allocation3 [shape = 's32[1]{0}', space=sflag, size = 0x4, scoped, tag = 'scoped memory for tpu_custom_call.1']
    #allocation4 [shape = 's32[1]{0}', space=sflag, size = 0x4, scoped, tag = 'scoped memory for tpu_custom_call.1']
    #allocation5 [shape = 'u8[16384]{0}', space=vmem, size = 0x4000, scoped, tag = 'input window, operand 3, single buffered']
    #allocation6 [shape = 's32[1]{0}', space=sflag, size = 0x4, scoped, tag = 'scoped memory for tpu_custom_call.1']
    #allocation7 [shape = 'u8[16384]{0}', space=vmem, size = 0x4000, scoped, tag = 'input window, operand 4, single buffered']
    #allocation8 [shape = 'u8[16384]{0}', space=vmem, size = 0x4000, scoped, tag = 'input window, operand 5, single buffered']
    #allocation9 [shape = 's32[1]{0}', space=sflag, size = 0x4, scoped, tag = 'scoped memory for tpu_custom_call.1']
    #allocation10 [shape = 'u8[1024]{0}', space=vmem, size = 0x400, scoped, tag = 'output window, operand 0, single buffered']
    %12 = vsyncpa [#allocation3], 0
    %13 = vsyncpa [#allocation6], 0
    %14 = vsyncpa [#allocation9], 0
    %15 = vsyncpa [#allocation4], 0
    // Predicated region
    $region2: #{tpu_custom_call.1} parent=1 // pred_check
      _
    $region3: #{tpu_custom_call.1} parent=1 // pred_check_branch
      %17 = sbr.rel (0) target = $region5
    $region4: #{tpu_custom_call.1} parent=1 // pred_region
      %s19 = ssub.s32 256, 256
      %20 = vsyncadd [#allocation3], %s19
      %s21 = sshll.u32 [#allocation2], 4
      %s22 = int_to_ptr.vmem [resolvable:$true] %s21
      %27 = dma.hbm_to_vmem [thread:$0]  %s0, 256, %s22, [#allocation3], 128, 128, 8
    $region5: #{tpu_custom_call.1} parent=1 // pred_fallthru
      _
    // Predicated region
    $region6: #{tpu_custom_call.1} parent=1 // pred_check
      _
    $region7: #{tpu_custom_call.1} parent=1 // pred_check_branch
      %29 = sbr.rel (0) target = $region9
    $region8: #{tpu_custom_call.1} parent=1 // pred_region
      _
    $region9: #{tpu_custom_call.1} parent=1 // pred_fallthru
      _
    // Predicated region
    $region10: #{tpu_custom_call.1} parent=1 // pred_check
      _
    $region11: #{tpu_custom_call.1} parent=1 // pred_check_branch
      %31 = sbr.rel (0) target = $region13
    $region12: #{tpu_custom_call.1} parent=1 // pred_region
      _
    $region13: #{tpu_custom_call.1} parent=1 // pred_fallthru
      _
    // Predicated region
    $region14: #{tpu_custom_call.1} parent=1 // pred_check
      _
    $region15: #{tpu_custom_call.1} parent=1 // pred_check_branch
      %33 = sbr.rel (0) target = $region17
    $region16: #{tpu_custom_call.1} parent=1 // pred_region
      %s35 = ssub.s32 512, 512
      %36 = vsyncadd [#allocation6], %s35
      %s37 = sshll.u32 [#allocation5], 4
      %s38 = int_to_ptr.vmem [resolvable:$true] %s37
      %43 = dma.hbm_to_vmem [thread:$0]  %s3, 512, %s38, [#allocation6], 128, 128, 8
    $region17: #{tpu_custom_call.1} parent=1 // pred_fallthru
      _
    // Predicated region
    $region18: #{tpu_custom_call.1} parent=1 // pred_check
      _
    $region19: #{tpu_custom_call.1} parent=1 // pred_check_branch
      %45 = sbr.rel (0) target = $region21
    $region20: #{tpu_custom_call.1} parent=1 // pred_region
      %s47 = ssub.s32 512, 512
      %48 = vsyncadd [#allocation6], %s47
      %s49 = sshll.u32 [#allocation7], 4
      %s50 = int_to_ptr.vmem [resolvable:$true] %s49
      %55 = dma.hbm_to_vmem [thread:$0]  %s4, 512, %s50, [#allocation6], 128, 128, 8
    $region21: #{tpu_custom_call.1} parent=1 // pred_fallthru
      _
    // Predicated region
    $region22: #{tpu_custom_call.1} parent=1 // pred_check
      _
    $region23: #{tpu_custom_call.1} parent=1 // pred_check_branch
      %57 = sbr.rel (0) target = $region25
    $region24: #{tpu_custom_call.1} parent=1 // pred_region
      %s59 = ssub.s32 512, 512
      %60 = vsyncadd [#allocation9], %s59
      %s61 = sshll.u32 [#allocation8], 4
      %s62 = int_to_ptr.vmem [resolvable:$true] %s61
      %67 = dma.hbm_to_vmem [thread:$0]  %s5, 512, %s62, [#allocation9], 128, 128, 8
    $region25: #{tpu_custom_call.1} parent=1 // pred_fallthru
      _
    // Predicated region
    $region26: #{tpu_custom_call.1} parent=1 // pred_check
      _
    $region27: #{tpu_custom_call.1} parent=1 // pred_check_branch
      %69 = sbr.rel (0) target = $region29
    $region28: #{tpu_custom_call.1} parent=1 // pred_region
      _
    $region29: #{tpu_custom_call.1} parent=1 // pred_fallthru
      _
    // Predicated region
    $region30: #{tpu_custom_call.1} parent=1 // pred_check
      _
    $region31: #{tpu_custom_call.1} parent=1 // pred_check_branch
      %71 = sbr.rel (0) target = $region33
    $region32: #{tpu_custom_call.1} parent=1 // pred_region
      %72 = dma.done [#allocation3], 256
    $region33: #{tpu_custom_call.1} parent=1 // pred_fallthru
      _
    // Predicated region
    $region34: #{tpu_custom_call.1} parent=1 // pred_check
      _
    $region35: #{tpu_custom_call.1} parent=1 // pred_check_branch
      %74 = sbr.rel (0) target = $region37
    $region36: #{tpu_custom_call.1} parent=1 // pred_region
      %75 = dma.done [#allocation6], 512
    $region37: #{tpu_custom_call.1} parent=1 // pred_fallthru
      _
    // Predicated region
    $region38: #{tpu_custom_call.1} parent=1 // pred_check
      _
    $region39: #{tpu_custom_call.1} parent=1 // pred_check_branch
      %77 = sbr.rel (0) target = $region41
    $region40: #{tpu_custom_call.1} parent=1 // pred_region
      %78 = dma.done [#allocation6], 512
    $region41: #{tpu_custom_call.1} parent=1 // pred_fallthru
      _
    // Predicated region
    $region42: #{tpu_custom_call.1} parent=1 // pred_check
      _
    $region43: #{tpu_custom_call.1} parent=1 // pred_check_branch
      %80 = sbr.rel (0) target = $region45
    $region44: #{tpu_custom_call.1} parent=1 // pred_region
      %81 = dma.done [#allocation9], 512
    $region45: #{tpu_custom_call.1} parent=1 // pred_fallthru
      _
    %v82 = vld [vmem:[#allocation2] sm:$0xff]
    %v83 = vld [vmem:[#allocation2 + $0x8] sm:$0xff]
    %vm84 = vcmask 261120
    %v85 = vsel %vm84, %v82, 0.0
    %86 = vadd.xlane.f32.xlu0 %v85
    %v87 = vpop.xlane.xlu0 %86
    %v88 = vsel %vm84, %v83, 0.0
    %89 = vadd.xlane.f32.xlu0 %v88
    %v90 = vpop.xlane.xlu0 %89
    %v91 = vrcp.pop 32.0
    %v92 = vmul.f32 %v87, %v91
    %v93 = vmul.f32 %v90, %v91
    %v94 = vsub.f32 %v82, %v92
    %v95 = vsub.f32 %v83, %v93
    %v96 = vmul.f32 %v94, %v94
    %v97 = vmul.f32 %v95, %v95
    %v98 = vsel %vm84, %v96, 0.0
    %99 = vadd.xlane.f32.xlu0 %v98
    %v100 = vpop.xlane.xlu0 %99
    %v101 = vsel %vm84, %v97, 0.0
    %102 = vadd.xlane.f32.xlu0 %v101
    %v103 = vpop.xlane.xlu0 %102
    %v104 = vmul.f32 %v100, %v91
    %v105 = vmul.f32 %v103, %v91
    %v106 = vadd.f32 %v104, 1e-05
    %v107 = vadd.f32 %v105, 1e-05
    %v108 = vrsqrt.pop %v106
    %v109 = vrsqrt.pop %v107
    %v110 = vmul.f32 %v94, %v108
    %v111 = vmul.f32 %v95, %v109
    %v112 = vld [vmem:[%s1] sm:$0x1]
    %v114 = vlaneseq
    %v115 = vshrl.u32 %v114, 7
    %v116 = vsub.s32 0, %v115
    %v117 = vrot.slane %v112, %v116
    %v119 = vmul.f32 %v110, %v117
    %v120 = vmul.f32 %v111, %v117
    %v121 = vld [vmem:[%s2] sm:$0x1]
    %v123 = vlaneseq
    %v124 = vshrl.u32 %v123, 7
    %v125 = vsub.s32 0, %v124
    %v126 = vrot.slane %v121, %v125
    %v128 = vadd.f32 %v119, %v126
    %v129 = vadd.f32 %v120, %v126
    %v130 = vld [vmem:[#allocation5] sm:$0xff]
    %v131 = vld [vmem:[#allocation5 + $0x8] sm:$0xff]
    %v132 = vld [vmem:[#allocation5 + $0x10] sm:$0xff]
    %v133 = vld [vmem:[#allocation5 + $0x18] sm:$0xff]
    %v136 = vrot.slane %v129, 7
    %vm137 = vcmask 1041409
    %v138 = vsel %vm137, %v136, %v128
    %v139 = vsel %vm84, %v138, 0
    %141 = vmatprep.subr.mxu0 0.0
    %142 = vmatpush1.msra.mxu0 %v130
    %143 = vmatprep.subr.mxu0 0.0
    %144 = vmatpush1.msra.mxu0 %v131
    %145 = vmatprep.subr.mxu0 0.0
    %146 = vmatpush1.msra.mxu0 %v132
    %147 = vmatprep.subr.mxu0 0.0
    %148 = vmatpush1.msra.mxu0 %v133
    %149 = vmatprep.subr.mxu0 0.0
    %150 = vmatpush1.msra.mxu0 0.0
    %151 = vmatprep.subr.mxu0 0.0
    %152 = vmatpush1.msra.mxu0 0.0
    %153 = vmatprep.subr.mxu0 0.0
    %154 = vmatpush1.msra.mxu0 0.0
    %155 = vmatprep.subr.mxu0 0.0
    %156 = vmatpush1.msra.mxu0 0.0
    %157 = vmatprep.subr.mxu0 0.0
    %158 = vmatpush1.msra.mxu0 0.0
    %159 = vmatprep.subr.mxu0 0.0
    %160 = vmatpush1.msra.mxu0 0.0
    %161 = vmatprep.subr.mxu0 0.0
    %162 = vmatpush1.msra.mxu0 0.0
    %163 = vmatprep.subr.mxu0 0.0
    %164 = vmatpush1.msra.mxu0 0.0
    %165 = vmatprep.subr.mxu0 0.0
    %166 = vmatpush1.msra.mxu0 0.0
    %167 = vmatprep.subr.mxu0 0.0
    %168 = vmatpush1.msra.mxu0 0.0
    %169 = vmatprep.subr.mxu0 0.0
    %170 = vmatpush1.msra.mxu0 0.0
    %171 = vmatprep.subr.mxu0 0.0
    %172 = vmatpush1.msra.mxu0 0.0
    %173 = vmatprep.subr.mxu0 0.0
    %174 = vmatpush1.msra.mxu0 0.0
    %175 = vmatprep.subr.mxu0 0.0
    %176 = vmatpush1.msra.mxu0 0.0
    %177 = vmatprep.subr.mxu0 0.0
    %178 = vmatpush1.msra.mxu0 0.0
    %179 = vmatprep.subr.mxu0 0.0
    %180 = vmatpush1.msra.mxu0 0.0
    %181 = vmatprep.subr.mxu0 0.0
    %182 = vmatpush1.msra.mxu0 0.0
    %183 = vmatprep.subr.mxu0 0.0
    %184 = vmatpush1.msra.mxu0 0.0
    %185 = vmatprep.subr.mxu0 0.0
    %186 = vmatpush1.msra.mxu0 0.0
    %187 = vmatprep.subr.mxu0 0.0
    %188 = vmatpush1.msra.mxu0 0.0
    %189 = vmatprep.subr.mxu0 0.0
    %190 = vmatpush1.msra.mxu0 0.0
    %191 = vmatprep.subr.mxu0 0.0
    %192 = vmatpush1.msra.mxu0 0.0
    %193 = vmatprep.subr.mxu0 0.0
    %194 = vmatpush1.msra.mxu0 0.0
    %195 = vmatprep.subr.mxu0 0.0
    %196 = vmatpush1.msra.mxu0 0.0
    %197 = vmatprep.subr.mxu0 0.0
    %198 = vmatpush1.msra.mxu0 0.0
    %199 = vmatprep.subr.mxu0 0.0
    %200 = vmatpush1.msra.mxu0 0.0
    %201 = vmatprep.subr.mxu0 0.0
    %202 = vmatpush1.msra.mxu0 0.0
    %203 = vmatprep.subr.mxu0 0.0
    %204 = vmatpush1.msra.mxu0 0.0
    %205 = vmatprep.mubr.f32.mxu0 0.0
    %206 = vmatmul.mubr.f32.gmra.mrb[0].mxu0 %v139
    %v207 = vpop.f32.mrb[0].mxu0
    %v208 = vadd.f32 0.0, %v207
    %v209 = vpop.f32.mrb[0].mxu0
    %210 = vdwg.mxu0
    %v211 = vld [vmem:[#allocation7] sm:$0xff]
    %v212 = vld [vmem:[#allocation7 + $0x8] sm:$0xff]
    %v213 = vld [vmem:[#allocation7 + $0x10] sm:$0xff]
    %v214 = vld [vmem:[#allocation7 + $0x18] sm:$0xff]
    %v215 = vsel %vm84, %v128, 0
    %v217 = vsel %vm84, %v129, 0
    %219 = vmatprep.subr.mxu0 0.0
    %220 = vmatpush1.msra.mxu0 %v211
    %221 = vmatprep.subr.mxu0 0.0
    %222 = vmatpush1.msra.mxu0 %v212
    %223 = vmatprep.subr.mxu0 0.0
    %224 = vmatpush1.msra.mxu0 %v213
    %225 = vmatprep.subr.mxu0 0.0
    %226 = vmatpush1.msra.mxu0 %v214
    %227 = vmatprep.subr.mxu0 0.0
    %228 = vmatpush1.msra.mxu0 0.0
    %229 = vmatprep.subr.mxu0 0.0
    %230 = vmatpush1.msra.mxu0 0.0
    %231 = vmatprep.subr.mxu0 0.0
    %232 = vmatpush1.msra.mxu0 0.0
    %233 = vmatprep.subr.mxu0 0.0
    %234 = vmatpush1.msra.mxu0 0.0
    %235 = vmatprep.subr.mxu0 0.0
    %236 = vmatpush1.msra.mxu0 0.0
    %237 = vmatprep.subr.mxu0 0.0
    %238 = vmatpush1.msra.mxu0 0.0
    %239 = vmatprep.subr.mxu0 0.0
    %240 = vmatpush1.msra.mxu0 0.0
    %241 = vmatprep.subr.mxu0 0.0
    %242 = vmatpush1.msra.mxu0 0.0
    %243 = vmatprep.subr.mxu0 0.0
    %244 = vmatpush1.msra.mxu0 0.0
    %245 = vmatprep.subr.mxu0 0.0
    %246 = vmatpush1.msra.mxu0 0.0
    %247 = vmatprep.subr.mxu0 0.0
    %248 = vmatpush1.msra.mxu0 0.0
    %249 = vmatprep.subr.mxu0 0.0
    %250 = vmatpush1.msra.mxu0 0.0
    %251 = vmatprep.subr.mxu0 0.0
    %252 = vmatpush1.msra.mxu0 0.0
    %253 = vmatprep.subr.mxu0 0.0
    %254 = vmatpush1.msra.mxu0 0.0
    %255 = vmatprep.subr.mxu0 0.0
    %256 = vmatpush1.msra.mxu0 0.0
    %257 = vmatprep.subr.mxu0 0.0
    %258 = vmatpush1.msra.mxu0 0.0
    %259 = vmatprep.subr.mxu0 0.0
    %260 = vmatpush1.msra.mxu0 0.0
    %261 = vmatprep.subr.mxu0 0.0
    %262 = vmatpush1.msra.mxu0 0.0
    %263 = vmatprep.subr.mxu0 0.0
    %264 = vmatpush1.msra.mxu0 0.0
    %265 = vmatprep.subr.mxu0 0.0
    %266 = vmatpush1.msra.mxu0 0.0
    %267 = vmatprep.subr.mxu0 0.0
    %268 = vmatpush1.msra.mxu0 0.0
    %269 = vmatprep.subr.mxu0 0.0
    %270 = vmatpush1.msra.mxu0 0.0
    %271 = vmatprep.subr.mxu0 0.0
    %272 = vmatpush1.msra.mxu0 0.0
    %273 = vmatprep.subr.mxu0 0.0
    %274 = vmatpush1.msra.mxu0 0.0
    %275 = vmatprep.subr.mxu0 0.0
    %276 = vmatpush1.msra.mxu0 0.0
    %277 = vmatprep.subr.mxu0 0.0
    %278 = vmatpush1.msra.mxu0 0.0
    %279 = vmatprep.subr.mxu0 0.0
    %280 = vmatpush1.msra.mxu0 0.0
    %281 = vmatprep.subr.mxu0 0.0
    %282 = vmatpush1.msra.mxu0 0.0
    %283 = vmatprep.mubr.f32.mxu0 0.0
    %284 = vmatmul.mubr.f32.gmra.mrb[0].mxu0 %v215
    %v285 = vpop.f32.mrb[0].mxu0
    %v286 = vadd.f32 0.0, %v285
    %v287 = vpop.f32.mrb[0].mxu0
    %288 = vmatprep.mubr.f32.mxu0 0.0
    %289 = vmatmul.mubr.f32.gmra.mrb[0].mxu0 %v217
    %v290 = vpop.f32.mrb[0].mxu0
    %v291 = vadd.f32 0.0, %v290
    %v292 = vpop.f32.mrb[0].mxu0
    %293 = vdwg.mxu0
    %v294 = vlaneseq
    %v295 = vshrl.u32 %v294, 7
    %v296 = vlaneseq
    %v297 = vand.u32 %v296, 127
    %v298 = vmul.u32 %v295, 8
    %vm299 = vcmp.ge.s32.totalorder %v297, %v298
    %v300 = vadd.s32 %v298, 8
    %vm301 = vcmp.lt.s32.totalorder %v297, %v300
    %vm302 = vmand %vm299, %vm301
    %v303 = vsel %vm302, 1, 0
    %v304 = vcvt.s32.f32 %v303
    %v307 = vunpack.c.l.s4 1966171168
    %v308 = vunpack.c.0.s8 %v307
    %v309 = vlaneseq
    %v310 = vshrl.u32 %v309, 7
    %v311 = vsub.s32 %v308, %v310
    %v312 = vrot.slane %v208, %v311
    %v313 = vcombine.high %v312, %v312
    %v315 = vunpack.c.l.s4 1966171168
    %v316 = vunpack.c.0.s8 %v315
    %v317 = vlaneseq
    %v318 = vshrl.u32 %v317, 7
    %v319 = vsub.s32 %v316, %v318
    %v320 = vrot.slane %v312, %v319
    %v322 = vunpack.c.l.s4 1966171168
    %v323 = vunpack.c.0.s8 %v322
    %v324 = vlaneseq
    %v325 = vshrl.u32 %v324, 7
    %v326 = vsub.s32 %v323, %v325
    %v327 = vrot.slane %v313, %v326
    %v328 = vlaneseq
    %v329 = vshrl.u32 %v328, 7
    %v330 = vsub.s32 0, %v329
    %v331 = vrot.slane %v320, %v330
    %v332 = vlaneseq
    %v333 = vshrl.u32 %v332, 7
    %v334 = vsub.s32 0, %v333
    %v335 = vrot.slane %v327, %v334
    %v338 = vmul.f32 %v286, %v331
    %v339 = vmul.f32 %v291, %v335
    %v341 = vsel %vm84, %v338, 0
    %v344 = vsel %vm84, %v339, 0
    %v347 = vsel %vm84, %v304, 0
    %349 = vmatprep.subr.mxu0 0.0
    %350 = vmatpush1.xpose.msra.mxu0 %v347
    %351 = vmatprep.subr.mxu0 0.0
    %352 = vmatpush1.xpose.msra.mxu0 0.0
    %353 = vmatprep.subr.mxu0 0.0
    %354 = vmatpush1.xpose.msra.mxu0 0.0
    %355 = vmatprep.subr.mxu0 0.0
    %356 = vmatpush1.xpose.msra.mxu0 0.0
    %357 = vmatprep.subr.mxu0 0.0
    %358 = vmatpush1.xpose.msra.mxu0 0.0
    %359 = vmatprep.subr.mxu0 0.0
    %360 = vmatpush1.xpose.msra.mxu0 0.0
    %361 = vmatprep.subr.mxu0 0.0
    %362 = vmatpush1.xpose.msra.mxu0 0.0
    %363 = vmatprep.subr.mxu0 0.0
    %364 = vmatpush1.xpose.msra.mxu0 0.0
    %365 = vmatprep.subr.mxu0 0.0
    %366 = vmatpush1.xpose.msra.mxu0 0.0
    %367 = vmatprep.subr.mxu0 0.0
    %368 = vmatpush1.xpose.msra.mxu0 0.0
    %369 = vmatprep.subr.mxu0 0.0
    %370 = vmatpush1.xpose.msra.mxu0 0.0
    %371 = vmatprep.subr.mxu0 0.0
    %372 = vmatpush1.xpose.msra.mxu0 0.0
    %373 = vmatprep.subr.mxu0 0.0
    %374 = vmatpush1.xpose.msra.mxu0 0.0
    %375 = vmatprep.subr.mxu0 0.0
    %376 = vmatpush1.xpose.msra.mxu0 0.0
    %377 = vmatprep.subr.mxu0 0.0
    %378 = vmatpush1.xpose.msra.mxu0 0.0
    %379 = vmatprep.subr.mxu0 0.0
    %380 = vmatpush1.xpose.msra.mxu0 0.0
    %381 = vmatprep.subr.mxu0 0.0
    %382 = vmatpush1.xpose.msra.mxu0 0.0
    %383 = vmatprep.subr.mxu0 0.0
    %384 = vmatpush1.xpose.msra.mxu0 0.0
    %385 = vmatprep.subr.mxu0 0.0
    %386 = vmatpush1.xpose.msra.mxu0 0.0
    %387 = vmatprep.subr.mxu0 0.0
    %388 = vmatpush1.xpose.msra.mxu0 0.0
    %389 = vmatprep.subr.mxu0 0.0
    %390 = vmatpush1.xpose.msra.mxu0 0.0
    %391 = vmatprep.subr.mxu0 0.0
    %392 = vmatpush1.xpose.msra.mxu0 0.0
    %393 = vmatprep.subr.mxu0 0.0
    %394 = vmatpush1.xpose.msra.mxu0 0.0
    %395 = vmatprep.subr.mxu0 0.0
    %396 = vmatpush1.xpose.msra.mxu0 0.0
    %397 = vmatprep.subr.mxu0 0.0
    %398 = vmatpush1.xpose.msra.mxu0 0.0
    %399 = vmatprep.subr.mxu0 0.0
    %400 = vmatpush1.xpose.msra.mxu0 0.0
    %401 = vmatprep.subr.mxu0 0.0
    %402 = vmatpush1.xpose.msra.mxu0 0.0
    %403 = vmatprep.subr.mxu0 0.0
    %404 = vmatpush1.xpose.msra.mxu0 0.0
    %405 = vmatprep.subr.mxu0 0.0
    %406 = vmatpush1.xpose.msra.mxu0 0.0
    %407 = vmatprep.subr.mxu0 0.0
    %408 = vmatpush1.xpose.msra.mxu0 0.0
    %409 = vmatprep.subr.mxu0 0.0
    %410 = vmatpush1.xpose.msra.mxu0 0.0
    %411 = vmatprep.subr.mxu0 0.0
    %412 = vmatpush1.xpose.msra.mxu0 0.0
    %413 = vmatprep.mubr.f32.mxu0 0.0
    %414 = vmatmul.mubr.f32.gmra.mrb[0].mxu0 %v341
    %v415 = vpop.f32.mrb[0].mxu0
    %v416 = vadd.f32 0.0, %v415
    %v417 = vpop.f32.mrb[0].mxu0
    %418 = vmatprep.mubr.f32.mxu0 0.0
    %419 = vmatmul.mubr.f32.gmra.mrb[0].mxu0 %v344
    %v420 = vpop.f32.mrb[0].mxu0
    %v421 = vadd.f32 0.0, %v420
    %v422 = vpop.f32.mrb[0].mxu0
    %423 = vdwg.mxu0
    %v424 = vmul.f32 %v416, 0.35355338
    %v425 = vmul.f32 %v421, 0.35355338
    %vm426 = vcmask 31744
    %v427 = vsel %vm426, %v424, -inf
    %v428 = vrot.slane %v427, 4
    %v429 = vmax.f32 %v427, %v428
    %v430 = vrot.slane %v429, 2
    %v431 = vmax.f32 %v429, %v430
    %v432 = vrot.slane %v431, 1
    %v433 = vmax.f32 %v431, %v432
    %v434 = vsel %vm426, %v425, -inf
    %v435 = vrot.slane %v434, 4
    %v436 = vmax.f32 %v434, %v435
    %v437 = vrot.slane %v436, 2
    %v438 = vmax.f32 %v436, %v437
    %v439 = vrot.slane %v438, 1
    %v440 = vmax.f32 %v438, %v439
    %v441 = vsub.f32 %v424, %v433
    %v442 = vsub.f32 %v425, %v440
    %v443 = vmul.f32 %v441, 1.442695
    %v444 = vpow.pop %v443
    %v445 = vmul.f32 %v442, 1.442695
    %v446 = vpow.pop %v445
    %v447 = vsel %vm426, %v444, 0.0
    %v448 = vrot.slane %v447, 4
    %v449 = vadd.f32 %v447, %v448
    %v450 = vrot.slane %v449, 2
    %v451 = vadd.f32 %v449, %v450
    %v452 = vrot.slane %v451, 1
    %v453 = vadd.f32 %v451, %v452
    %v454 = vsel %vm426, %v446, 0.0
    %v455 = vrot.slane %v454, 4
    %v456 = vadd.f32 %v454, %v455
    %v457 = vrot.slane %v456, 2
    %v458 = vadd.f32 %v456, %v457
    %v459 = vrot.slane %v458, 1
    %v460 = vadd.f32 %v458, %v459
    %v461 = vrcp.pop %v453
    %v462 = vmul.f32 %v444, %v461
    %v463 = vrcp.pop %v460
    %v464 = vmul.f32 %v446, %v463
    %v466 = vsel %vm426, %v462, 0
    %v469 = vsel %vm426, %v464, 0
    %vm471 = vcmask 1043456
    %v472 = vsel %vm471, %v304, 0
    %474 = vmatprep.subr.mxu0 0.0
    %475 = vmatpush1.msra.mxu0 %v472
    %476 = vmatprep.subr.mxu0 0.0
    %477 = vmatpush1.msra.mxu0 0.0
    %478 = vmatprep.subr.mxu0 0.0
    %479 = vmatpush1.msra.mxu0 0.0
    %480 = vmatprep.subr.mxu0 0.0
    %481 = vmatpush1.msra.mxu0 0.0
    %482 = vmatprep.subr.mxu0 0.0
    %483 = vmatpush1.msra.mxu0 0.0
    %484 = vmatprep.subr.mxu0 0.0
    %485 = vmatpush1.msra.mxu0 0.0
    %486 = vmatprep.subr.mxu0 0.0
    %487 = vmatpush1.msra.mxu0 0.0
    %488 = vmatprep.subr.mxu0 0.0
    %489 = vmatpush1.msra.mxu0 0.0
    %490 = vmatprep.subr.mxu0 0.0
    %491 = vmatpush1.msra.mxu0 0.0
    %492 = vmatprep.subr.mxu0 0.0
    %493 = vmatpush1.msra.mxu0 0.0
    %494 = vmatprep.subr.mxu0 0.0
    %495 = vmatpush1.msra.mxu0 0.0
    %496 = vmatprep.subr.mxu0 0.0
    %497 = vmatpush1.msra.mxu0 0.0
    %498 = vmatprep.subr.mxu0 0.0
    %499 = vmatpush1.msra.mxu0 0.0
    %500 = vmatprep.subr.mxu0 0.0
    %501 = vmatpush1.msra.mxu0 0.0
    %502 = vmatprep.subr.mxu0 0.0
    %503 = vmatpush1.msra.mxu0 0.0
    %504 = vmatprep.subr.mxu0 0.0
    %505 = vmatpush1.msra.mxu0 0.0
    %506 = vmatprep.subr.mxu0 0.0
    %507 = vmatpush1.msra.mxu0 0.0
    %508 = vmatprep.subr.mxu0 0.0
    %509 = vmatpush1.msra.mxu0 0.0
    %510 = vmatprep.subr.mxu0 0.0
    %511 = vmatpush1.msra.mxu0 0.0
    %512 = vmatprep.subr.mxu0 0.0
    %513 = vmatpush1.msra.mxu0 0.0
    %514 = vmatprep.subr.mxu0 0.0
    %515 = vmatpush1.msra.mxu0 0.0
    %516 = vmatprep.subr.mxu0 0.0
    %517 = vmatpush1.msra.mxu0 0.0
    %518 = vmatprep.subr.mxu0 0.0
    %519 = vmatpush1.msra.mxu0 0.0
    %520 = vmatprep.subr.mxu0 0.0
    %521 = vmatpush1.msra.mxu0 0.0
    %522 = vmatprep.subr.mxu0 0.0
    %523 = vmatpush1.msra.mxu0 0.0
    %524 = vmatprep.subr.mxu0 0.0
    %525 = vmatpush1.msra.mxu0 0.0
    %526 = vmatprep.subr.mxu0 0.0
    %527 = vmatpush1.msra.mxu0 0.0
    %528 = vmatprep.subr.mxu0 0.0
    %529 = vmatpush1.msra.mxu0 0.0
    %530 = vmatprep.subr.mxu0 0.0
    %531 = vmatpush1.msra.mxu0 0.0
    %532 = vmatprep.subr.mxu0 0.0
    %533 = vmatpush1.msra.mxu0 0.0
    %534 = vmatprep.subr.mxu0 0.0
    %535 = vmatpush1.msra.mxu0 0.0
    %536 = vmatprep.subr.mxu0 0.0
    %537 = vmatpush1.msra.mxu0 0.0
    %538 = vmatprep.mubr.f32.mxu0 0.0
    %539 = vmatmul.mubr.f32.gmra.mrb[0].mxu0 %v466
    %v540 = vpop.f32.mrb[0].mxu0
    %v541 = vadd.f32 0.0, %v540
    %v542 = vpop.f32.mrb[0].mxu0
    %543 = vmatprep.mubr.f32.mxu0 0.0
    %544 = vmatmul.mubr.f32.gmra.mrb[0].mxu0 %v469
    %v545 = vpop.f32.mrb[0].mxu0
    %v546 = vadd.f32 0.0, %v545
    %v547 = vpop.f32.mrb[0].mxu0
    %548 = vdwg.mxu0
    %551 = vrot.lane.b32.xlu0 %v286, 96
    %v552 = vpop.permute.xlu0 %551
    %553 = vrot.lane.b32.xlu0 %v291, 96
    %v554 = vpop.permute.xlu0 %553
    %v557 = vmul.f32 %v541, %v552
    %v558 = vmul.f32 %v546, %v554
    %v559 = vsel %vm84, %v557, 0.0
    %v560 = vrot.slane %v559, 4
    %v561 = vadd.f32 %v559, %v560
    %v562 = vrot.slane %v561, 2
    %v563 = vadd.f32 %v561, %v562
    %v564 = vrot.slane %v563, 1
    %v565 = vadd.f32 %v563, %v564
    %v566 = vsel %vm84, %v558, 0.0
    %v567 = vrot.slane %v566, 4
    %v568 = vadd.f32 %v566, %v567
    %v569 = vrot.slane %v568, 2
    %v570 = vadd.f32 %v568, %v569
    %v571 = vrot.slane %v570, 1
    %v572 = vadd.f32 %v570, %v571
    %v573 = vld [vmem:[#allocation8] sm:$0xff]
    %v574 = vld [vmem:[#allocation8 + $0x8] sm:$0xff]
    %v575 = vld [vmem:[#allocation8 + $0x10] sm:$0xff]
    %v576 = vld [vmem:[#allocation8 + $0x18] sm:$0xff]
    %v577 = vld [vmem:[%s6] sm:$0x1]
    %v579 = vlaneseq
    %v580 = vshrl.u32 %v579, 7
    %v581 = vsub.s32 0, %v580
    %v582 = vrot.slane %v577, %v581
    %v586 = vsel %vm137, %v572, %v565
    %v587 = vsel %vm84, %v586, 0
    %589 = vmatprep.subr.mxu0 0.0
    %590 = vmatpush1.msra.mxu0 %v573
    %591 = vmatprep.subr.mxu0 0.0
    %592 = vmatpush1.msra.mxu0 %v574
    %593 = vmatprep.subr.mxu0 0.0
    %594 = vmatpush1.msra.mxu0 %v575
    %595 = vmatprep.subr.mxu0 0.0
    %596 = vmatpush1.msra.mxu0 %v576
    %597 = vmatprep.subr.mxu0 0.0
    %598 = vmatpush1.msra.mxu0 0.0
    %599 = vmatprep.subr.mxu0 0.0
    %600 = vmatpush1.msra.mxu0 0.0
    %601 = vmatprep.subr.mxu0 0.0
    %602 = vmatpush1.msra.mxu0 0.0
    %603 = vmatprep.subr.mxu0 0.0
    %604 = vmatpush1.msra.mxu0 0.0
    %605 = vmatprep.subr.mxu0 0.0
    %606 = vmatpush1.msra.mxu0 0.0
    %607 = vmatprep.subr.mxu0 0.0
    %608 = vmatpush1.msra.mxu0 0.0
    %609 = vmatprep.subr.mxu0 0.0
    %610 = vmatpush1.msra.mxu0 0.0
    %611 = vmatprep.subr.mxu0 0.0
    %612 = vmatpush1.msra.mxu0 0.0
    %613 = vmatprep.subr.mxu0 0.0
    %614 = vmatpush1.msra.mxu0 0.0
    %615 = vmatprep.subr.mxu0 0.0
    %616 = vmatpush1.msra.mxu0 0.0
    %617 = vmatprep.subr.mxu0 0.0
    %618 = vmatpush1.msra.mxu0 0.0
    %619 = vmatprep.subr.mxu0 0.0
    %620 = vmatpush1.msra.mxu0 0.0
    %621 = vmatprep.subr.mxu0 0.0
    %622 = vmatpush1.msra.mxu0 0.0
    %623 = vmatprep.subr.mxu0 0.0
    %624 = vmatpush1.msra.mxu0 0.0
    %625 = vmatprep.subr.mxu0 0.0
    %626 = vmatpush1.msra.mxu0 0.0
    %627 = vmatprep.subr.mxu0 0.0
    %628 = vmatpush1.msra.mxu0 0.0
    %629 = vmatprep.subr.mxu0 0.0
    %630 = vmatpush1.msra.mxu0 0.0
    %631 = vmatprep.subr.mxu0 0.0
    %632 = vmatpush1.msra.mxu0 0.0
    %633 = vmatprep.subr.mxu0 0.0
    %634 = vmatpush1.msra.mxu0 0.0
    %635 = vmatprep.subr.mxu0 0.0
    %636 = vmatpush1.msra.mxu0 0.0
    %637 = vmatprep.subr.mxu0 0.0
    %638 = vmatpush1.msra.mxu0 0.0
    %639 = vmatprep.subr.mxu0 0.0
    %640 = vmatpush1.msra.mxu0 0.0
    %641 = vmatprep.subr.mxu0 0.0
    %642 = vmatpush1.msra.mxu0 0.0
    %643 = vmatprep.subr.mxu0 0.0
    %644 = vmatpush1.msra.mxu0 0.0
    %645 = vmatprep.subr.mxu0 0.0
    %646 = vmatpush1.msra.mxu0 0.0
    %647 = vmatprep.subr.mxu0 0.0
    %648 = vmatpush1.msra.mxu0 0.0
    %649 = vmatprep.subr.mxu0 0.0
    %650 = vmatpush1.msra.mxu0 0.0
    %651 = vmatprep.subr.mxu0 0.0
    %652 = vmatpush1.msra.mxu0 0.0
    %653 = vmatprep.mubr.f32.mxu0 0.0
    %654 = vmatmul.mubr.f32.gmra.mrb[0].mxu0 %v587
    %v655 = vpop.f32.mrb[0].mxu0
    %v656 = vadd.f32 %v582, %v655
    %v657 = vpop.f32.mrb[0].mxu0
    %658 = vdwg.mxu0
    %v660 = vrot.slane %v656, 1
    %v663 = vadd.f32 %v82, %v656
    %v664 = vadd.f32 %v83, %v660
    %v667 = vrot.slane %v664, 7
    %v668 = vsel %vm137, %v667, %v663
    %vm670 = vcmask 254976
    %671 = vst.msk [vmem:[#allocation10] sm:$0x3] %vm670, %v668
    // Predicated region
    $region46: #{tpu_custom_call.1} parent=1 // pred_check
      _
    $region47: #{tpu_custom_call.1} parent=1 // pred_check_branch
      %673 = sbr.rel (0) target = $region49
    $region48: #{tpu_custom_call.1} parent=1 // pred_region
      %s675 = ssub.s32 32, 32
      %676 = vsyncadd [#allocation4], %s675
      %s678 = sshll.u32 [#allocation10], 4
      %s679 = int_to_ptr.vmem [resolvable:$true] %s678
      %681 = dma.vmem_to_hbm [thread:$0]  %s679, 32, %s7, [#allocation4]
    $region49: #{tpu_custom_call.1} parent=1 // pred_fallthru
      _
    // Predicated region
    $region50: #{tpu_custom_call.1} parent=1 // pred_check
      _
    $region51: #{tpu_custom_call.1} parent=1 // pred_check_branch
      %683 = sbr.rel (0) target = $region53
    $region52: #{tpu_custom_call.1} parent=1 // pred_region
      %684 = dma.done [#allocation4], 32
    $region53: #{tpu_custom_call.1} parent=1 // pred_fallthru
      _
    %685 = vsyncpa [#allocation3], 1
    %686 = vsyncpa [#allocation6], 1
    %687 = vsyncpa [#allocation9], 1
    %688 = vsyncpa [#allocation4], 1

</llo_original>
